<compile_context>
chip_gen: v7x
topology: tpu7x:2x2x1
jax: 0.10.0
libtpu: 0.0.40
codegen_flags: <defaults>
</compile_context>

<pallas_src>
import functools

import jax
import jax.numpy as jnp
from jax import lax
from jax.experimental import pallas as pl
from jax.experimental.pallas import tpu as pltpu


def _round_up(x, m):
    return ((x + m - 1) // m) * m


def _convnet_kernel(x_ref, w1_ref, b1_ref, w2_ref, b2_ref, omax_ref, oavg_ref,
                    *, batch, seq, valid_len, motiflen, nummotif):
    """One block of `batch` samples per grid step.

    x_ref   : (batch*seq, Cin)          compute dtype (f32 or bf16)
    w1_ref  : (motiflen*Cin, M)         compute dtype
    b1_ref  : (1, M)                    f32
    w2_ref  : (motiflen*M, M)           compute dtype
    b2_ref  : (1, M)                    f32
    omax_ref: (batch, M)                f32   (global max pool)
    oavg_ref: (batch, M)                f32   (global avg pool)
    """
    rows = batch * seq
    x = x_ref[...]                                           # (rows, Cin)

    # ---- conv1: fused im2col matmul (single MXU dot, contraction motiflen*Cin) ----
    cols1 = [x]
    for k in range(1, motiflen):
        # shift rows up by k (result[i] = x[i + k]); wrapped/crossed rows only
        # affect padded positions l >= L1, which never feed valid outputs.
        cols1.append(pltpu.roll(x, shift=rows - k, axis=0))
    xcol1 = jnp.concatenate(cols1, axis=-1)                  # (rows, motiflen*Cin)
    h1 = jnp.dot(xcol1, w1_ref[...], preferred_element_type=jnp.float32)
    r1 = jnp.maximum(h1 + b1_ref[...], 0.0)                  # (rows, M)  f32
    r1c = r1.astype(x.dtype)                                 # MXU input dtype

    # ---- conv2: same fused im2col matmul (contraction motiflen*M) ----
    cols2 = [r1c]
    for k in range(1, motiflen):
        cols2.append(pltpu.roll(r1c, shift=rows - k, axis=0))
    xcol2 = jnp.concatenate(cols2, axis=-1)                  # (rows, motiflen*M)
    h2 = jnp.dot(xcol2, w2_ref[...], preferred_element_type=jnp.float32)
    r2 = jnp.maximum(h2 + b2_ref[...], 0.0)                  # (rows, M)  f32

    # ---- per-sample global max / mean pool over the valid length ----
    r2b = r2.reshape(batch, seq, nummotif)                   # free reshape (seq % 16 == 0)
    pos = lax.broadcasted_iota(jnp.int32, (batch, seq, 1), 1)
    r2m = jnp.where(pos < valid_len, r2b, 0.0)               # post-ReLU >= 0 so 0-mask is
                                                             # safe for both max and sum
    omax_ref[...] = jnp.max(r2m, axis=1).astype(omax_ref.dtype)          # (batch, M)
    oavg_ref[...] = (jnp.sum(r2m, axis=1) * (1.0 / valid_len)).astype(oavg_ref.dtype)


def convnet_base_forward(x_ncl, w1, b1, w2, b2, pool_type="maxavg",
                         compute_dtype=jnp.float32, block_batch=64):
    """x_ncl: (N, 4, L); w1: (M, 4, motiflen); w2: (M, M, motiflen); b1, b2: (M,)."""
    N, Cin, L = x_ncl.shape
    M, _, motiflen = w1.shape
    L1 = L - motiflen + 1
    L2 = L1 - motiflen + 1
    assert L2 >= 1, "sequence too short for two VALID convolutions"

    # Per-sample padded length (multiple of 16 so the flat/3D reshapes are layout-trivial
    # for both f32 and bf16 tilings).
    seq = _round_up(L, 16)

    # Batch tile under a rough VMEM budget (lane-padded tiles: x dbl-buffer + im2col
    # intermediates ~ 10 slabs of seq*512 bytes per sample).
    per_sample_bytes = seq * 512 * 10
    budget_bytes = 12 * 1024 * 1024
    B = max(1, min(block_batch, max(1, budget_bytes // per_sample_bytes), N))
    B = max(8, _round_up(B, 8))
    N_pad = _round_up(N, B)
    num_blocks = N_pad // B

    # ---- layout glue in plain JAX ----
    x_nlc = jnp.transpose(x_ncl, (0, 2, 1)).astype(compute_dtype)        # (N, L, Cin)
    x_nlc = jnp.pad(x_nlc, ((0, N_pad - N), (0, seq - L), (0, 0)))       # zero pad
    x_flat = x_nlc.reshape(N_pad * seq, Cin)                             # (N_pad*seq, Cin)

    # w[m, c, k] -> w_mat[k*Cin + c, m]  (matches the k-major im2col column order)
    w1_m = jnp.transpose(w1, (2, 1, 0)).reshape(motiflen * Cin, M).astype(compute_dtype)
    w2_m = jnp.transpose(w2, (2, 1, 0)).reshape(motiflen * M, M).astype(compute_dtype)
    b1_r = b1.reshape(1, M).astype(jnp.float32)
    b2_r = b2.reshape(1, M).astype(jnp.float32)

    kernel = functools.partial(_convnet_kernel, batch=B, seq=seq, valid_len=L2,
                               motiflen=motiflen, nummotif=M)

    omax, oavg = pl.pallas_call(
        kernel,
        out_shape=(jax.ShapeDtypeStruct((N_pad, M), jnp.float32),
                   jax.ShapeDtypeStruct((N_pad, M), jnp.float32)),
        grid=(num_blocks,),
        in_specs=[
            pl.BlockSpec((B * seq, Cin), lambda n: (n, 0)),              # x batch block
            pl.BlockSpec((motiflen * Cin, M), lambda n: (0, 0)),         # w1 (resident)
            pl.BlockSpec((1, M), lambda n: (0, 0)),                      # b1 (resident)
            pl.BlockSpec((motiflen * M, M), lambda n: (0, 0)),           # w2 (resident)
            pl.BlockSpec((1, M), lambda n: (0, 0)),                      # b2 (resident)
        ],
        out_specs=(pl.BlockSpec((B, M), lambda n: (n, 0)),
                   pl.BlockSpec((B, M), lambda n: (n, 0))),
        compiler_params=pltpu.CompilerParams(
            dimension_semantics=("parallel",)),                          # batches independent
    )(x_flat, w1_m, b1_r, w2_m, b2_r)

    maxpool = omax[:N]
    if pool_type != "maxavg":
        return maxpool
    return jnp.concatenate([maxpool, oavg[:N]], axis=1)                  # (N, 2M)


def _reference_forward(x, w1, b1, w2, b2):
    """Plain-JAX reference mirroring F.conv1d semantics (NCL, VALID, stride 1)."""
    conv1 = lax.conv_general_dilated(x, w1, (1,), "VALID",
                                     dimension_numbers=("NCH", "OIH", "NCH"))
    r1 = jnp.maximum(conv1 + b1[None, :, None], 0.0)
    conv2 = lax.conv_general_dilated(r1, w2, (1,), "VALID",
                                     dimension_numbers=("NCH", "OIH", "NCH"))
    r2 = jnp.maximum(conv2 + b2[None, :, None], 0.0)
    return jnp.concatenate([jnp.max(r2, axis=2), jnp.mean(r2, axis=2)], axis=1)


if __name__ == "__main__":
    # Deterministic synthetic parameters (shapes per ConvNet_Base.__init__).
    nummotif, motiflen = 16, 5
    N, Cin, L = 2, 4, 32

    key = jax.random.PRNGKey(0)
    k1, k2, k3, k4, k5 = jax.random.split(key, 5)

    lim1 = (6.0 / (Cin * motiflen + nummotif * motiflen)) ** 0.5
    lim2 = (6.0 / (nummotif * motiflen + nummotif * motiflen)) ** 0.5

    w1 = jax.random.uniform(k1, (nummotif, Cin, motiflen), jnp.float32, -lim1, lim1)
    b1 = -jax.random.normal(k2, (nummotif,), jnp.float32)       # wRect1 = -normal(...)
    w2 = jax.random.uniform(k3, (nummotif, nummotif, motiflen), jnp.float32, -lim2, lim2)
    b2 = -jax.random.normal(k4, (nummotif,), jnp.float32)       # wRect2 = -normal(...)

    x = jax.random.normal(k5, (N, Cin, L), jnp.float32)

    # ---- float32 path: tight check against the XLA conv reference ----
    pool_f32 = jax.block_until_ready(
        convnet_base_forward(x, w1, b1, w2, b2, pool_type="maxavg",
                             compute_dtype=jnp.float32))
    ref = _reference_forward(x, w1, b1, w2, b2)
    assert pool_f32.shape == (N, 2 * nummotif), pool_f32.shape
    assert jnp.allclose(pool_f32, ref, atol=1e-3, rtol=1e-3), "f32 mismatch vs reference"

    # ---- bf16 MXU-input path (f32 accumulation): loose check vs bf16-rounded ref ----
    pool_bf16 = jax.block_until_ready(
        convnet_base_forward(x, w1, b1, w2, b2, pool_type="maxavg",
                             compute_dtype=jnp.bfloat16))
    ref_bf16 = _reference_forward(
        x.astype(jnp.bfloat16).astype(jnp.float32),
        w1.astype(jnp.bfloat16).astype(jnp.float32), b1,
        w2.astype(jnp.bfloat16).astype(jnp.float32), b2)
    assert jnp.allclose(pool_bf16, ref_bf16, atol=5e-2, rtol=5e-2), "bf16 mismatch vs reference"

    print("KERNEL_OK")
</pallas_src>

<mosaic_0001>
module attributes {stable_mosaic.version = 11 : i64} {
  func.func @_convnet_kernel(%arg0: i32, %arg1: memref<256x4xf32, #tpu.memory_space<vmem>>, %arg2: memref<20x16xf32, #tpu.memory_space<vmem>>, %arg3: memref<1x16xf32, #tpu.memory_space<vmem>>, %arg4: memref<80x16xf32, #tpu.memory_space<vmem>>, %arg5: memref<1x16xf32, #tpu.memory_space<vmem>>, %arg6: memref<8x16xf32, #tpu.memory_space<vmem>>, %arg7: memref<8x16xf32, #tpu.memory_space<vmem>>) attributes {dimension_semantics = [#tpu.dimension_semantics<parallel>], iteration_bounds = array<i64: 1>, scalar_prefetch = 0 : i64, scratch_operands = 0 : i64, tpu.core_type = #tpu.core_type<tc>, window_params = [{transform_indices = @transform_0, window_bounds = array<i64: 256, 4>}, {pipeline_mode = #tpu.pipeline_mode<synchronous>, transform_indices = @transform_1, window_bounds = array<i64: 20, 16>}, {pipeline_mode = #tpu.pipeline_mode<synchronous>, transform_indices = @transform_2, window_bounds = array<i64: 1, 16>}, {pipeline_mode = #tpu.pipeline_mode<synchronous>, transform_indices = @transform_3, window_bounds = array<i64: 80, 16>}, {pipeline_mode = #tpu.pipeline_mode<synchronous>, transform_indices = @transform_4, window_bounds = array<i64: 1, 16>}, {transform_indices = @transform_5, window_bounds = array<i64: 8, 16>}, {transform_indices = @transform_6, window_bounds = array<i64: 8, 16>}]} {
    %c0 = arith.constant 0 : index
    %c0_0 = arith.constant 0 : index
    %0 = vector.load %arg1[%c0, %c0_0] : memref<256x4xf32, #tpu.memory_space<vmem>>, vector<256x4xf32>
    %c255_i32 = arith.constant 255 : i32
    %1 = tpu.dynamic_rotate %0 by %c255_i32 dim 0 : vector<256x4xf32>, i32 -> vector<256x4xf32>
    %c254_i32 = arith.constant 254 : i32
    %2 = tpu.dynamic_rotate %0 by %c254_i32 dim 0 : vector<256x4xf32>, i32 -> vector<256x4xf32>
    %c253_i32 = arith.constant 253 : i32
    %3 = tpu.dynamic_rotate %0 by %c253_i32 dim 0 : vector<256x4xf32>, i32 -> vector<256x4xf32>
    %c252_i32 = arith.constant 252 : i32
    %4 = tpu.dynamic_rotate %0 by %c252_i32 dim 0 : vector<256x4xf32>, i32 -> vector<256x4xf32>
    %5 = tpu.concatenate %0, %1, %2, %3, %4 in 1 : vector<256x4xf32>, vector<256x4xf32>, vector<256x4xf32>, vector<256x4xf32>, vector<256x4xf32> -> vector<256x20xf32>
    %c0_1 = arith.constant 0 : index
    %c0_2 = arith.constant 0 : index
    %6 = vector.load %arg2[%c0_1, %c0_2] : memref<20x16xf32, #tpu.memory_space<vmem>>, vector<20x16xf32>
    %cst = arith.constant dense<0.000000e+00> : vector<256x16xf32>
    %7 = tpu.matmul %5, %6, %cst {dimension_numbers = #tpu.dot_dimension_numbers<[1], [0], [0], [1], [0, 0, 1, 1], [], []>} : vector<256x20xf32>, vector<20x16xf32>, vector<256x16xf32> -> vector<256x16xf32>
    %c0_3 = arith.constant 0 : index
    %c0_4 = arith.constant 0 : index
    %8 = vector.load %arg3[%c0_3, %c0_4] : memref<1x16xf32, #tpu.memory_space<vmem>>, vector<1x16xf32>
    %9 = vector.broadcast %8 : vector<1x16xf32> to vector<256x16xf32>
    %10 = arith.addf %7, %9 : vector<256x16xf32>
    %cst_5 = arith.constant 0.000000e+00 : f32
    %11 = vector.broadcast %cst_5 : f32 to vector<256x16xf32>
    %12 = arith.maximumf %10, %11 : vector<256x16xf32>
    %c255_i32_6 = arith.constant 255 : i32
    %13 = tpu.dynamic_rotate %12 by %c255_i32_6 dim 0 : vector<256x16xf32>, i32 -> vector<256x16xf32>
    %c254_i32_7 = arith.constant 254 : i32
    %14 = tpu.dynamic_rotate %12 by %c254_i32_7 dim 0 : vector<256x16xf32>, i32 -> vector<256x16xf32>
    %c253_i32_8 = arith.constant 253 : i32
    %15 = tpu.dynamic_rotate %12 by %c253_i32_8 dim 0 : vector<256x16xf32>, i32 -> vector<256x16xf32>
    %c252_i32_9 = arith.constant 252 : i32
    %16 = tpu.dynamic_rotate %12 by %c252_i32_9 dim 0 : vector<256x16xf32>, i32 -> vector<256x16xf32>
    %17 = tpu.concatenate %12, %13, %14, %15, %16 in 1 : vector<256x16xf32>, vector<256x16xf32>, vector<256x16xf32>, vector<256x16xf32>, vector<256x16xf32> -> vector<256x80xf32>
    %c0_10 = arith.constant 0 : index
    %c0_11 = arith.constant 0 : index
    %18 = vector.load %arg4[%c0_10, %c0_11] : memref<80x16xf32, #tpu.memory_space<vmem>>, vector<80x16xf32>
    %cst_12 = arith.constant dense<0.000000e+00> : vector<256x16xf32>
    %19 = tpu.matmul %17, %18, %cst_12 {dimension_numbers = #tpu.dot_dimension_numbers<[1], [0], [0], [1], [0, 0, 1, 1], [], []>} : vector<256x80xf32>, vector<80x16xf32>, vector<256x16xf32> -> vector<256x16xf32>
    %c0_13 = arith.constant 0 : index
    %c0_14 = arith.constant 0 : index
    %20 = vector.load %arg5[%c0_13, %c0_14] : memref<1x16xf32, #tpu.memory_space<vmem>>, vector<1x16xf32>
    %21 = vector.broadcast %20 : vector<1x16xf32> to vector<256x16xf32>
    %22 = arith.addf %19, %21 : vector<256x16xf32>
    %cst_15 = arith.constant 0.000000e+00 : f32
    %23 = vector.broadcast %cst_15 : f32 to vector<256x16xf32>
    %24 = arith.maximumf %22, %23 : vector<256x16xf32>
    %25 = vector.shape_cast %24 : vector<256x16xf32> to vector<8x32x16xf32>
    %26 = tpu.iota {dimensions = array<i32: 1>} : vector<8x32x1xi32>
    %c24_i32 = arith.constant 24 : i32
    %27 = vector.broadcast %c24_i32 : i32 to vector<8x32x1xi32>
    %28 = arith.cmpi slt, %26, %27 : vector<8x32x1xi32>
    %cst_16 = arith.constant 0.000000e+00 : f32
    %29 = vector.shape_cast %28 : vector<8x32x1xi1> to vector<8x32x1xi1>
    %30 = vector.broadcast %29 : vector<8x32x1xi1> to vector<8x32x16xi1>
    %31 = vector.broadcast %cst_16 : f32 to vector<8x32x16xf32>
    %32 = arith.select %30, %25, %31 : vector<8x32x16xi1>, vector<8x32x16xf32>
    %cst_17 = arith.constant dense<0xFF800000> : vector<8x16xf32>
    %33 = vector.multi_reduction <maximumf>, %32, %cst_17 [1] : vector<8x32x16xf32> to vector<8x16xf32>
    %c0_18 = arith.constant 0 : index
    %c0_19 = arith.constant 0 : index
    %34 = vector.load %arg6[%c0_18, %c0_19] : memref<8x16xf32, #tpu.memory_space<vmem>>, vector<8x16xf32>
    tpu.vector_store %arg6[%c0_18, %c0_19], %33 {strides = array<i32>} : memref<8x16xf32, #tpu.memory_space<vmem>>, vector<8x16xf32>,
    %cst_20 = arith.constant dense<0.000000e+00> : vector<8x16xf32>
    %35 = vector.multi_reduction <add>, %32, %cst_20 [1] : vector<8x32x16xf32> to vector<8x16xf32>
    %cst_21 = arith.constant 0.0416666679 : f32
    %36 = vector.broadcast %cst_21 : f32 to vector<8x16xf32>
    %37 = arith.mulf %35, %36 : vector<8x16xf32>
    %c0_22 = arith.constant 0 : index
    %c0_23 = arith.constant 0 : index
    %38 = vector.load %arg7[%c0_22, %c0_23] : memref<8x16xf32, #tpu.memory_space<vmem>>, vector<8x16xf32>
    tpu.vector_store %arg7[%c0_22, %c0_23], %37 {strides = array<i32>} : memref<8x16xf32, #tpu.memory_space<vmem>>, vector<8x16xf32>,
    return
  }
  func.func @transform_0(%arg0: i32) -> (i32, i32) {
    %c0_i32 = arith.constant 0 : i32
    %c0_i32_0 = arith.constant 0 : i32
    return %arg0, %c0_i32 : i32, i32
  }
  func.func @transform_1(%arg0: i32) -> (i32, i32) {
    %c0_i32 = arith.constant 0 : i32
    %c0_i32_0 = arith.constant 0 : i32
    %c0_i32_1 = arith.constant 0 : i32
    return %c0_i32, %c0_i32_0 : i32, i32
  }
  func.func @transform_2(%arg0: i32) -> (i32, i32) {
    %c0_i32 = arith.constant 0 : i32
    %c0_i32_0 = arith.constant 0 : i32
    %c0_i32_1 = arith.constant 0 : i32
    return %c0_i32, %c0_i32_0 : i32, i32
  }
  func.func @transform_3(%arg0: i32) -> (i32, i32) {
    %c0_i32 = arith.constant 0 : i32
    %c0_i32_0 = arith.constant 0 : i32
    %c0_i32_1 = arith.constant 0 : i32
    return %c0_i32, %c0_i32_0 : i32, i32
  }
  func.func @transform_4(%arg0: i32) -> (i32, i32) {
    %c0_i32 = arith.constant 0 : i32
    %c0_i32_0 = arith.constant 0 : i32
    %c0_i32_1 = arith.constant 0 : i32
    return %c0_i32, %c0_i32_0 : i32, i32
  }
  func.func @transform_5(%arg0: i32) -> (i32, i32) {
    %c0_i32 = arith.constant 0 : i32
    %c0_i32_0 = arith.constant 0 : i32
    return %arg0, %c0_i32 : i32, i32
  }
  func.func @transform_6(%arg0: i32) -> (i32, i32) {
    %c0_i32 = arith.constant 0 : i32
    %c0_i32_0 = arith.constant 0 : i32
    return %arg0, %c0_i32 : i32, i32
  }
}

</mosaic_0001>

<llo_original>
// kernel: tpu_custom_call.1
$region0: #{tpu_custom_call.1}
  #allocation0 [shape = 'u32[]', space=smem, size = 0x4, offset = 0x4, fixed_abs, tag = 'smem constant byte address 0x4 - core index']
  #allocation1 [shape = 'u32[144,128]{1,0:T(1,128)}', space=vmem, size = 0x12000, scoped, tag = 'internal scratch']
  %s0 = inlined_call_operand.vmem [shape: f32[256,4], index: 0, kind: input, shape index: {}]
  %s1 = inlined_call_operand.vmem [shape: f32[20,16], index: 1, kind: input, shape index: {}]
  %s2 = inlined_call_operand.vmem [shape: f32[1,16], index: 2, kind: input, shape index: {}]
  %s3 = inlined_call_operand.vmem [shape: f32[80,16], index: 3, kind: input, shape index: {}]
  %s4 = inlined_call_operand.vmem [shape: f32[1,16], index: 4, kind: input, shape index: {}]
  %s5 = inlined_call_operand.hbm [shape: f32[8,16], index: 5, kind: output, shape index: {0}]
  %s6 = inlined_call_operand.hbm [shape: f32[8,16], index: 6, kind: output, shape index: {1}]
  %7 = xla_tuple %s5, %s6
  %s8 = sld [smem:[#allocation0]]
  $region38: #{tpu_custom_call.1} parent=0
    _
  %s10 = ssub.s32 1, %s8
  %s11 = scalar_select 0, %s10, %s8
  $region1: #{tpu_custom_call.1} parent=0
    #allocation2 [shape = 'u8[4096]{0}', space=vmem, size = 0x1000, scoped, tag = 'output window, operand 0, single buffered']
    #allocation3 [shape = 's32[1]{0}', space=sflag, size = 0x4, scoped, tag = 'scoped memory for tpu_custom_call.1']
    #allocation4 [shape = 'u8[4096]{0}', space=vmem, size = 0x1000, scoped, tag = 'output window, operand 1, single buffered']
    #allocation5 [shape = 's32[1]{0}', space=sflag, size = 0x4, scoped, tag = 'scoped memory for tpu_custom_call.1']
    %12 = vsyncpa [#allocation3], 0
    %13 = vsyncpa [#allocation5], 0
    // Predicated region
    $region2: #{tpu_custom_call.1} parent=1 // pred_check
      _
    $region3: #{tpu_custom_call.1} parent=1 // pred_check_branch
      %15 = sbr.rel (0) target = $region5
    $region4: #{tpu_custom_call.1} parent=1 // pred_region
      _
    $region5: #{tpu_custom_call.1} parent=1 // pred_fallthru
      _
    // Predicated region
    $region6: #{tpu_custom_call.1} parent=1 // pred_check
      _
    $region7: #{tpu_custom_call.1} parent=1 // pred_check_branch
      %17 = sbr.rel (0) target = $region9
    $region8: #{tpu_custom_call.1} parent=1 // pred_region
      _
    $region9: #{tpu_custom_call.1} parent=1 // pred_fallthru
      _
    // Predicated region
    $region10: #{tpu_custom_call.1} parent=1 // pred_check
      _
    $region11: #{tpu_custom_call.1} parent=1 // pred_check_branch
      %19 = sbr.rel (0) target = $region13
    $region12: #{tpu_custom_call.1} parent=1 // pred_region
      _
    $region13: #{tpu_custom_call.1} parent=1 // pred_fallthru
      _
    // Predicated region
    $region14: #{tpu_custom_call.1} parent=1 // pred_check
      _
    $region15: #{tpu_custom_call.1} parent=1 // pred_check_branch
      %21 = sbr.rel (0) target = $region17
    $region16: #{tpu_custom_call.1} parent=1 // pred_region
      _
    $region17: #{tpu_custom_call.1} parent=1 // pred_fallthru
      _
    // Predicated region
    $region18: #{tpu_custom_call.1} parent=1 // pred_check
      _
    $region19: #{tpu_custom_call.1} parent=1 // pred_check_branch
      %23 = sbr.rel (0) target = $region21
    $region20: #{tpu_custom_call.1} parent=1 // pred_region
      _
    $region21: #{tpu_custom_call.1} parent=1 // pred_fallthru
      _
    %v24 = vld [vmem:[%s0] sm:$0xff]
    %v25 = vld [vmem:[%s0 + $0x8] sm:$0xff]
    %v26 = vld [vmem:[%s0 + $0x10] sm:$0xff]
    %v27 = vld [vmem:[%s0 + $0x18] sm:$0xff]
    %v28 = vld [vmem:[%s0 + $0x20] sm:$0xff]
    %v29 = vld [vmem:[%s0 + $0x28] sm:$0xff]
    %v30 = vld [vmem:[%s0 + $0x30] sm:$0xff]
    %v31 = vld [vmem:[%s0 + $0x38] sm:$0xff]
    %v32 = vld [vmem:[%s0 + $0x40] sm:$0xff]
    %v33 = vld [vmem:[%s0 + $0x48] sm:$0xff]
    %v34 = vld [vmem:[%s0 + $0x50] sm:$0xff]
    %v35 = vld [vmem:[%s0 + $0x58] sm:$0xff]
    %v36 = vld [vmem:[%s0 + $0x60] sm:$0xff]
    %v37 = vld [vmem:[%s0 + $0x68] sm:$0xff]
    %v38 = vld [vmem:[%s0 + $0x70] sm:$0xff]
    %v39 = vld [vmem:[%s0 + $0x78] sm:$0xff]
    %v40 = vld [vmem:[%s0 + $0x80] sm:$0xff]
    %v41 = vld [vmem:[%s0 + $0x88] sm:$0xff]
    %v42 = vld [vmem:[%s0 + $0x90] sm:$0xff]
    %v43 = vld [vmem:[%s0 + $0x98] sm:$0xff]
    %v44 = vld [vmem:[%s0 + $0xa0] sm:$0xff]
    %v45 = vld [vmem:[%s0 + $0xa8] sm:$0xff]
    %v46 = vld [vmem:[%s0 + $0xb0] sm:$0xff]
    %v47 = vld [vmem:[%s0 + $0xb8] sm:$0xff]
    %v48 = vld [vmem:[%s0 + $0xc0] sm:$0xff]
    %v49 = vld [vmem:[%s0 + $0xc8] sm:$0xff]
    %v50 = vld [vmem:[%s0 + $0xd0] sm:$0xff]
    %v51 = vld [vmem:[%s0 + $0xd8] sm:$0xff]
    %v52 = vld [vmem:[%s0 + $0xe0] sm:$0xff]
    %v53 = vld [vmem:[%s0 + $0xe8] sm:$0xff]
    %v54 = vld [vmem:[%s0 + $0xf0] sm:$0xff]
    %v55 = vld [vmem:[%s0 + $0xf8] sm:$0xff]
    %v56 = vrot.slane %v24, 1
    %v57 = vrot.slane %v25, 1
    %v58 = vrot.slane %v26, 1
    %v59 = vrot.slane %v27, 1
    %v60 = vrot.slane %v28, 1
    %v61 = vrot.slane %v29, 1
    %v62 = vrot.slane %v30, 1
    %v63 = vrot.slane %v31, 1
    %v64 = vrot.slane %v32, 1
    %v65 = vrot.slane %v33, 1
    %v66 = vrot.slane %v34, 1
    %v67 = vrot.slane %v35, 1
    %v68 = vrot.slane %v36, 1
    %v69 = vrot.slane %v37, 1
    %v70 = vrot.slane %v38, 1
    %v71 = vrot.slane %v39, 1
    %v72 = vrot.slane %v40, 1
    %v73 = vrot.slane %v41, 1
    %v74 = vrot.slane %v42, 1
    %v75 = vrot.slane %v43, 1
    %v76 = vrot.slane %v44, 1
    %v77 = vrot.slane %v45, 1
    %v78 = vrot.slane %v46, 1
    %v79 = vrot.slane %v47, 1
    %v80 = vrot.slane %v48, 1
    %v81 = vrot.slane %v49, 1
    %v82 = vrot.slane %v50, 1
    %v83 = vrot.slane %v51, 1
    %v84 = vrot.slane %v52, 1
    %v85 = vrot.slane %v53, 1
    %v86 = vrot.slane %v54, 1
    %v87 = vrot.slane %v55, 1
    %v88 = vlaneseq
    %v89 = vshrl.u32 %v88, 7
    %vm90 = vcmp.lt.s32.totalorder %v89, 7
    %v91 = vsel %vm90, %v86, %v87
    %v92 = vsel %vm90, %v85, %v86
    %v93 = vsel %vm90, %v84, %v85
    %v94 = vsel %vm90, %v83, %v84
    %v95 = vsel %vm90, %v82, %v83
    %v96 = vsel %vm90, %v81, %v82
    %v97 = vsel %vm90, %v80, %v81
    %v98 = vsel %vm90, %v79, %v80
    %v99 = vsel %vm90, %v78, %v79
    %v100 = vsel %vm90, %v77, %v78
    %v101 = vsel %vm90, %v76, %v77
    %v102 = vsel %vm90, %v75, %v76
    %v103 = vsel %vm90, %v74, %v75
    %v104 = vsel %vm90, %v73, %v74
    %v105 = vsel %vm90, %v72, %v73
    %v106 = vsel %vm90, %v71, %v72
    %v107 = vsel %vm90, %v70, %v71
    %v108 = vsel %vm90, %v69, %v70
    %v109 = vsel %vm90, %v68, %v69
    %v110 = vsel %vm90, %v67, %v68
    %v111 = vsel %vm90, %v66, %v67
    %v112 = vsel %vm90, %v65, %v66
    %v113 = vsel %vm90, %v64, %v65
    %v114 = vsel %vm90, %v63, %v64
    %v115 = vsel %vm90, %v62, %v63
    %v116 = vsel %vm90, %v61, %v62
    %v117 = vsel %vm90, %v60, %v61
    %v118 = vsel %vm90, %v59, %v60
    %v119 = vsel %vm90, %v58, %v59
    %v120 = vsel %vm90, %v57, %v58
    %v121 = vsel %vm90, %v56, %v57
    %v122 = vsel %vm90, %v87, %v56
    %v123 = vrot.slane %v24, 2
    %v124 = vrot.slane %v25, 2
    %v125 = vrot.slane %v26, 2
    %v126 = vrot.slane %v27, 2
    %v127 = vrot.slane %v28, 2
    %v128 = vrot.slane %v29, 2
    %v129 = vrot.slane %v30, 2
    %v130 = vrot.slane %v31, 2
    %v131 = vrot.slane %v32, 2
    %v132 = vrot.slane %v33, 2
    %v133 = vrot.slane %v34, 2
    %v134 = vrot.slane %v35, 2
    %v135 = vrot.slane %v36, 2
    %v136 = vrot.slane %v37, 2
    %v137 = vrot.slane %v38, 2
    %v138 = vrot.slane %v39, 2
    %v139 = vrot.slane %v40, 2
    %v140 = vrot.slane %v41, 2
    %v141 = vrot.slane %v42, 2
    %v142 = vrot.slane %v43, 2
    %v143 = vrot.slane %v44, 2
    %v144 = vrot.slane %v45, 2
    %v145 = vrot.slane %v46, 2
    %v146 = vrot.slane %v47, 2
    %v147 = vrot.slane %v48, 2
    %v148 = vrot.slane %v49, 2
    %v149 = vrot.slane %v50, 2
    %v150 = vrot.slane %v51, 2
    %v151 = vrot.slane %v52, 2
    %v152 = vrot.slane %v53, 2
    %v153 = vrot.slane %v54, 2
    %v154 = vrot.slane %v55, 2
    %vm155 = vcmp.lt.s32.totalorder %v89, 6
    %v156 = vsel %vm155, %v153, %v154
    %v157 = vsel %vm155, %v152, %v153
    %v158 = vsel %vm155, %v151, %v152
    %v159 = vsel %vm155, %v150, %v151
    %v160 = vsel %vm155, %v149, %v150
    %v161 = vsel %vm155, %v148, %v149
    %v162 = vsel %vm155, %v147, %v148
    %v163 = vsel %vm155, %v146, %v147
    %v164 = vsel %vm155, %v145, %v146
    %v165 = vsel %vm155, %v144, %v145
    %v166 = vsel %vm155, %v143, %v144
    %v167 = vsel %vm155, %v142, %v143
    %v168 = vsel %vm155, %v141, %v142
    %v169 = vsel %vm155, %v140, %v141
    %v170 = vsel %vm155, %v139, %v140
    %v171 = vsel %vm155, %v138, %v139
    %v172 = vsel %vm155, %v137, %v138
    %v173 = vsel %vm155, %v136, %v137
    %v174 = vsel %vm155, %v135, %v136
    %v175 = vsel %vm155, %v134, %v135
    %v176 = vsel %vm155, %v133, %v134
    %v177 = vsel %vm155, %v132, %v133
    %v178 = vsel %vm155, %v131, %v132
    %v179 = vsel %vm155, %v130, %v131
    %v180 = vsel %vm155, %v129, %v130
    %v181 = vsel %vm155, %v128, %v129
    %v182 = vsel %vm155, %v127, %v128
    %v183 = vsel %vm155, %v126, %v127
    %v184 = vsel %vm155, %v125, %v126
    %v185 = vsel %vm155, %v124, %v125
    %v186 = vsel %vm155, %v123, %v124
    %v187 = vsel %vm155, %v154, %v123
    %v188 = vrot.slane %v24, 3
    %v189 = vrot.slane %v25, 3
    %v190 = vrot.slane %v26, 3
    %v191 = vrot.slane %v27, 3
    %v192 = vrot.slane %v28, 3
    %v193 = vrot.slane %v29, 3
    %v194 = vrot.slane %v30, 3
    %v195 = vrot.slane %v31, 3
    %v196 = vrot.slane %v32, 3
    %v197 = vrot.slane %v33, 3
    %v198 = vrot.slane %v34, 3
    %v199 = vrot.slane %v35, 3
    %v200 = vrot.slane %v36, 3
    %v201 = vrot.slane %v37, 3
    %v202 = vrot.slane %v38, 3
    %v203 = vrot.slane %v39, 3
    %v204 = vrot.slane %v40, 3
    %v205 = vrot.slane %v41, 3
    %v206 = vrot.slane %v42, 3
    %v207 = vrot.slane %v43, 3
    %v208 = vrot.slane %v44, 3
    %v209 = vrot.slane %v45, 3
    %v210 = vrot.slane %v46, 3
    %v211 = vrot.slane %v47, 3
    %v212 = vrot.slane %v48, 3
    %v213 = vrot.slane %v49, 3
    %v214 = vrot.slane %v50, 3
    %v215 = vrot.slane %v51, 3
    %v216 = vrot.slane %v52, 3
    %v217 = vrot.slane %v53, 3
    %v218 = vrot.slane %v54, 3
    %v219 = vrot.slane %v55, 3
    %vm220 = vcmp.lt.s32.totalorder %v89, 5
    %v221 = vsel %vm220, %v218, %v219
    %v222 = vsel %vm220, %v217, %v218
    %v223 = vsel %vm220, %v216, %v217
    %v224 = vsel %vm220, %v215, %v216
    %v225 = vsel %vm220, %v214, %v215
    %v226 = vsel %vm220, %v213, %v214
    %v227 = vsel %vm220, %v212, %v213
    %v228 = vsel %vm220, %v211, %v212
    %v229 = vsel %vm220, %v210, %v211
    %v230 = vsel %vm220, %v209, %v210
    %v231 = vsel %vm220, %v208, %v209
    %v232 = vsel %vm220, %v207, %v208
    %v233 = vsel %vm220, %v206, %v207
    %v234 = vsel %vm220, %v205, %v206
    %v235 = vsel %vm220, %v204, %v205
    %v236 = vsel %vm220, %v203, %v204
    %v237 = vsel %vm220, %v202, %v203
    %v238 = vsel %vm220, %v201, %v202
    %v239 = vsel %vm220, %v200, %v201
    %v240 = vsel %vm220, %v199, %v200
    %v241 = vsel %vm220, %v198, %v199
    %v242 = vsel %vm220, %v197, %v198
    %v243 = vsel %vm220, %v196, %v197
    %v244 = vsel %vm220, %v195, %v196
    %v245 = vsel %vm220, %v194, %v195
    %v246 = vsel %vm220, %v193, %v194
    %v247 = vsel %vm220, %v192, %v193
    %v248 = vsel %vm220, %v191, %v192
    %v249 = vsel %vm220, %v190, %v191
    %v250 = vsel %vm220, %v189, %v190
    %v251 = vsel %vm220, %v188, %v189
    %v252 = vsel %vm220, %v219, %v188
    %v253 = vrot.slane %v24, 4
    %v254 = vrot.slane %v25, 4
    %v255 = vrot.slane %v26, 4
    %v256 = vrot.slane %v27, 4
    %v257 = vrot.slane %v28, 4
    %v258 = vrot.slane %v29, 4
    %v259 = vrot.slane %v30, 4
    %v260 = vrot.slane %v31, 4
    %v261 = vrot.slane %v32, 4
    %v262 = vrot.slane %v33, 4
    %v263 = vrot.slane %v34, 4
    %v264 = vrot.slane %v35, 4
    %v265 = vrot.slane %v36, 4
    %v266 = vrot.slane %v37, 4
    %v267 = vrot.slane %v38, 4
    %v268 = vrot.slane %v39, 4
    %v269 = vrot.slane %v40, 4
    %v270 = vrot.slane %v41, 4
    %v271 = vrot.slane %v42, 4
    %v272 = vrot.slane %v43, 4
    %v273 = vrot.slane %v44, 4
    %v274 = vrot.slane %v45, 4
    %v275 = vrot.slane %v46, 4
    %v276 = vrot.slane %v47, 4
    %v277 = vrot.slane %v48, 4
    %v278 = vrot.slane %v49, 4
    %v279 = vrot.slane %v50, 4
    %v280 = vrot.slane %v51, 4
    %v281 = vrot.slane %v52, 4
    %v282 = vrot.slane %v53, 4
    %v283 = vrot.slane %v54, 4
    %v284 = vrot.slane %v55, 4
    %vm285 = vcmp.lt.s32.totalorder %v89, 4
    %v286 = vsel %vm285, %v283, %v284
    %v287 = vsel %vm285, %v282, %v283
    %v288 = vsel %vm285, %v281, %v282
    %v289 = vsel %vm285, %v280, %v281
    %v290 = vsel %vm285, %v279, %v280
    %v291 = vsel %vm285, %v278, %v279
    %v292 = vsel %vm285, %v277, %v278
    %v293 = vsel %vm285, %v276, %v277
    %v294 = vsel %vm285, %v275, %v276
    %v295 = vsel %vm285, %v274, %v275
    %v296 = vsel %vm285, %v273, %v274
    %v297 = vsel %vm285, %v272, %v273
    %v298 = vsel %vm285, %v271, %v272
    %v299 = vsel %vm285, %v270, %v271
    %v300 = vsel %vm285, %v269, %v270
    %v301 = vsel %vm285, %v268, %v269
    %v302 = vsel %vm285, %v267, %v268
    %v303 = vsel %vm285, %v266, %v267
    %v304 = vsel %vm285, %v265, %v266
    %v305 = vsel %vm285, %v264, %v265
    %v306 = vsel %vm285, %v263, %v264
    %v307 = vsel %vm285, %v262, %v263
    %v308 = vsel %vm285, %v261, %v262
    %v309 = vsel %vm285, %v260, %v261
    %v310 = vsel %vm285, %v259, %v260
    %v311 = vsel %vm285, %v258, %v259
    %v312 = vsel %vm285, %v257, %v258
    %v313 = vsel %vm285, %v256, %v257
    %v314 = vsel %vm285, %v255, %v256
    %v315 = vsel %vm285, %v254, %v255
    %v316 = vsel %vm285, %v253, %v254
    %v317 = vsel %vm285, %v284, %v253
    %350 = vrot.lane.b32.xlu0 %v121, 4
    %v351 = vpop.permute.xlu0 %350
    %352 = vrot.lane.b32.xlu0 %v120, 4
    %v353 = vpop.permute.xlu0 %352
    %354 = vrot.lane.b32.xlu0 %v119, 4
    %v355 = vpop.permute.xlu0 %354
    %356 = vrot.lane.b32.xlu0 %v118, 4
    %v357 = vpop.permute.xlu0 %356
    %358 = vrot.lane.b32.xlu0 %v117, 4
    %v359 = vpop.permute.xlu0 %358
    %360 = vrot.lane.b32.xlu0 %v116, 4
    %v361 = vpop.permute.xlu0 %360
    %362 = vrot.lane.b32.xlu0 %v115, 4
    %v363 = vpop.permute.xlu0 %362
    %364 = vrot.lane.b32.xlu0 %v114, 4
    %v365 = vpop.permute.xlu0 %364
    %366 = vrot.lane.b32.xlu0 %v113, 4
    %v367 = vpop.permute.xlu0 %366
    %368 = vrot.lane.b32.xlu0 %v112, 4
    %v369 = vpop.permute.xlu0 %368
    %370 = vrot.lane.b32.xlu0 %v111, 4
    %v371 = vpop.permute.xlu0 %370
    %372 = vrot.lane.b32.xlu0 %v110, 4
    %v373 = vpop.permute.xlu0 %372
    %374 = vrot.lane.b32.xlu0 %v109, 4
    %v375 = vpop.permute.xlu0 %374
    %376 = vrot.lane.b32.xlu0 %v108, 4
    %v377 = vpop.permute.xlu0 %376
    %378 = vrot.lane.b32.xlu0 %v107, 4
    %v379 = vpop.permute.xlu0 %378
    %380 = vrot.lane.b32.xlu0 %v106, 4
    %v381 = vpop.permute.xlu0 %380
    %382 = vrot.lane.b32.xlu0 %v105, 4
    %v383 = vpop.permute.xlu0 %382
    %384 = vrot.lane.b32.xlu0 %v104, 4
    %v385 = vpop.permute.xlu0 %384
    %386 = vrot.lane.b32.xlu0 %v103, 4
    %v387 = vpop.permute.xlu0 %386
    %388 = vrot.lane.b32.xlu0 %v102, 4
    %v389 = vpop.permute.xlu0 %388
    %390 = vrot.lane.b32.xlu0 %v101, 4
    %v391 = vpop.permute.xlu0 %390
    %392 = vrot.lane.b32.xlu0 %v100, 4
    %v393 = vpop.permute.xlu0 %392
    %394 = vrot.lane.b32.xlu0 %v99, 4
    %v395 = vpop.permute.xlu0 %394
    %396 = vrot.lane.b32.xlu0 %v98, 4
    %v397 = vpop.permute.xlu0 %396
    %398 = vrot.lane.b32.xlu0 %v97, 4
    %v399 = vpop.permute.xlu0 %398
    %400 = vrot.lane.b32.xlu0 %v96, 4
    %v401 = vpop.permute.xlu0 %400
    %402 = vrot.lane.b32.xlu0 %v95, 4
    %v403 = vpop.permute.xlu0 %402
    %404 = vrot.lane.b32.xlu0 %v94, 4
    %v405 = vpop.permute.xlu0 %404
    %406 = vrot.lane.b32.xlu0 %v93, 4
    %v407 = vpop.permute.xlu0 %406
    %408 = vrot.lane.b32.xlu0 %v92, 4
    %v409 = vpop.permute.xlu0 %408
    %410 = vrot.lane.b32.xlu0 %v91, 4
    %v411 = vpop.permute.xlu0 %410
    %412 = vrot.lane.b32.xlu0 %v122, 4
    %v413 = vpop.permute.xlu0 %412
    %478 = vrot.lane.b32.xlu0 %v186, 8
    %v479 = vpop.permute.xlu0 %478
    %480 = vrot.lane.b32.xlu0 %v185, 8
    %v481 = vpop.permute.xlu0 %480
    %482 = vrot.lane.b32.xlu0 %v184, 8
    %v483 = vpop.permute.xlu0 %482
    %484 = vrot.lane.b32.xlu0 %v183, 8
    %v485 = vpop.permute.xlu0 %484
    %486 = vrot.lane.b32.xlu0 %v182, 8
    %v487 = vpop.permute.xlu0 %486
    %488 = vrot.lane.b32.xlu0 %v181, 8
    %v489 = vpop.permute.xlu0 %488
    %490 = vrot.lane.b32.xlu0 %v180, 8
    %v491 = vpop.permute.xlu0 %490
    %492 = vrot.lane.b32.xlu0 %v179, 8
    %v493 = vpop.permute.xlu0 %492
    %494 = vrot.lane.b32.xlu0 %v178, 8
    %v495 = vpop.permute.xlu0 %494
    %496 = vrot.lane.b32.xlu0 %v177, 8
    %v497 = vpop.permute.xlu0 %496
    %498 = vrot.lane.b32.xlu0 %v176, 8
    %v499 = vpop.permute.xlu0 %498
    %500 = vrot.lane.b32.xlu0 %v175, 8
    %v501 = vpop.permute.xlu0 %500
    %502 = vrot.lane.b32.xlu0 %v174, 8
    %v503 = vpop.permute.xlu0 %502
    %504 = vrot.lane.b32.xlu0 %v173, 8
    %v505 = vpop.permute.xlu0 %504
    %506 = vrot.lane.b32.xlu0 %v172, 8
    %v507 = vpop.permute.xlu0 %506
    %508 = vrot.lane.b32.xlu0 %v171, 8
    %v509 = vpop.permute.xlu0 %508
    %510 = vrot.lane.b32.xlu0 %v170, 8
    %v511 = vpop.permute.xlu0 %510
    %512 = vrot.lane.b32.xlu0 %v169, 8
    %v513 = vpop.permute.xlu0 %512
    %514 = vrot.lane.b32.xlu0 %v168, 8
    %v515 = vpop.permute.xlu0 %514
    %516 = vrot.lane.b32.xlu0 %v167, 8
    %v517 = vpop.permute.xlu0 %516
    %518 = vrot.lane.b32.xlu0 %v166, 8
    %v519 = vpop.permute.xlu0 %518
    %520 = vrot.lane.b32.xlu0 %v165, 8
    %v521 = vpop.permute.xlu0 %520
    %522 = vrot.lane.b32.xlu0 %v164, 8
    %v523 = vpop.permute.xlu0 %522
    %524 = vrot.lane.b32.xlu0 %v163, 8
    %v525 = vpop.permute.xlu0 %524
    %526 = vrot.lane.b32.xlu0 %v162, 8
    %v527 = vpop.permute.xlu0 %526
    %528 = vrot.lane.b32.xlu0 %v161, 8
    %v529 = vpop.permute.xlu0 %528
    %530 = vrot.lane.b32.xlu0 %v160, 8
    %v531 = vpop.permute.xlu0 %530
    %532 = vrot.lane.b32.xlu0 %v159, 8
    %v533 = vpop.permute.xlu0 %532
    %534 = vrot.lane.b32.xlu0 %v158, 8
    %v535 = vpop.permute.xlu0 %534
    %536 = vrot.lane.b32.xlu0 %v157, 8
    %v537 = vpop.permute.xlu0 %536
    %538 = vrot.lane.b32.xlu0 %v156, 8
    %v539 = vpop.permute.xlu0 %538
    %540 = vrot.lane.b32.xlu0 %v187, 8
    %v541 = vpop.permute.xlu0 %540
    %606 = vrot.lane.b32.xlu0 %v251, 12
    %v607 = vpop.permute.xlu0 %606
    %608 = vrot.lane.b32.xlu0 %v250, 12
    %v609 = vpop.permute.xlu0 %608
    %610 = vrot.lane.b32.xlu0 %v249, 12
    %v611 = vpop.permute.xlu0 %610
    %612 = vrot.lane.b32.xlu0 %v248, 12
    %v613 = vpop.permute.xlu0 %612
    %614 = vrot.lane.b32.xlu0 %v247, 12
    %v615 = vpop.permute.xlu0 %614
    %616 = vrot.lane.b32.xlu0 %v246, 12
    %v617 = vpop.permute.xlu0 %616
    %618 = vrot.lane.b32.xlu0 %v245, 12
    %v619 = vpop.permute.xlu0 %618
    %620 = vrot.lane.b32.xlu0 %v244, 12
    %v621 = vpop.permute.xlu0 %620
    %622 = vrot.lane.b32.xlu0 %v243, 12
    %v623 = vpop.permute.xlu0 %622
    %624 = vrot.lane.b32.xlu0 %v242, 12
    %v625 = vpop.permute.xlu0 %624
    %626 = vrot.lane.b32.xlu0 %v241, 12
    %v627 = vpop.permute.xlu0 %626
    %628 = vrot.lane.b32.xlu0 %v240, 12
    %v629 = vpop.permute.xlu0 %628
    %630 = vrot.lane.b32.xlu0 %v239, 12
    %v631 = vpop.permute.xlu0 %630
    %632 = vrot.lane.b32.xlu0 %v238, 12
    %v633 = vpop.permute.xlu0 %632
    %634 = vrot.lane.b32.xlu0 %v237, 12
    %v635 = vpop.permute.xlu0 %634
    %636 = vrot.lane.b32.xlu0 %v236, 12
    %v637 = vpop.permute.xlu0 %636
    %638 = vrot.lane.b32.xlu0 %v235, 12
    %v639 = vpop.permute.xlu0 %638
    %640 = vrot.lane.b32.xlu0 %v234, 12
    %v641 = vpop.permute.xlu0 %640
    %642 = vrot.lane.b32.xlu0 %v233, 12
    %v643 = vpop.permute.xlu0 %642
    %644 = vrot.lane.b32.xlu0 %v232, 12
    %v645 = vpop.permute.xlu0 %644
    %646 = vrot.lane.b32.xlu0 %v231, 12
    %v647 = vpop.permute.xlu0 %646
    %648 = vrot.lane.b32.xlu0 %v230, 12
    %v649 = vpop.permute.xlu0 %648
    %650 = vrot.lane.b32.xlu0 %v229, 12
    %v651 = vpop.permute.xlu0 %650
    %652 = vrot.lane.b32.xlu0 %v228, 12
    %v653 = vpop.permute.xlu0 %652
    %654 = vrot.lane.b32.xlu0 %v227, 12
    %v655 = vpop.permute.xlu0 %654
    %656 = vrot.lane.b32.xlu0 %v226, 12
    %v657 = vpop.permute.xlu0 %656
    %658 = vrot.lane.b32.xlu0 %v225, 12
    %v659 = vpop.permute.xlu0 %658
    %660 = vrot.lane.b32.xlu0 %v224, 12
    %v661 = vpop.permute.xlu0 %660
    %662 = vrot.lane.b32.xlu0 %v223, 12
    %v663 = vpop.permute.xlu0 %662
    %664 = vrot.lane.b32.xlu0 %v222, 12
    %v665 = vpop.permute.xlu0 %664
    %666 = vrot.lane.b32.xlu0 %v221, 12
    %v667 = vpop.permute.xlu0 %666
    %668 = vrot.lane.b32.xlu0 %v252, 12
    %v669 = vpop.permute.xlu0 %668
    %734 = vrot.lane.b32.xlu0 %v316, 16
    %v735 = vpop.permute.xlu0 %734
    %736 = vrot.lane.b32.xlu0 %v315, 16
    %v737 = vpop.permute.xlu0 %736
    %738 = vrot.lane.b32.xlu0 %v314, 16
    %v739 = vpop.permute.xlu0 %738
    %740 = vrot.lane.b32.xlu0 %v313, 16
    %v741 = vpop.permute.xlu0 %740
    %742 = vrot.lane.b32.xlu0 %v312, 16
    %v743 = vpop.permute.xlu0 %742
    %744 = vrot.lane.b32.xlu0 %v311, 16
    %v745 = vpop.permute.xlu0 %744
    %746 = vrot.lane.b32.xlu0 %v310, 16
    %v747 = vpop.permute.xlu0 %746
    %748 = vrot.lane.b32.xlu0 %v309, 16
    %v749 = vpop.permute.xlu0 %748
    %750 = vrot.lane.b32.xlu0 %v308, 16
    %v751 = vpop.permute.xlu0 %750
    %752 = vrot.lane.b32.xlu0 %v307, 16
    %v753 = vpop.permute.xlu0 %752
    %754 = vrot.lane.b32.xlu0 %v306, 16
    %v755 = vpop.permute.xlu0 %754
    %756 = vrot.lane.b32.xlu0 %v305, 16
    %v757 = vpop.permute.xlu0 %756
    %758 = vrot.lane.b32.xlu0 %v304, 16
    %v759 = vpop.permute.xlu0 %758
    %760 = vrot.lane.b32.xlu0 %v303, 16
    %v761 = vpop.permute.xlu0 %760
    %762 = vrot.lane.b32.xlu0 %v302, 16
    %v763 = vpop.permute.xlu0 %762
    %764 = vrot.lane.b32.xlu0 %v301, 16
    %v765 = vpop.permute.xlu0 %764
    %766 = vrot.lane.b32.xlu0 %v300, 16
    %v767 = vpop.permute.xlu0 %766
    %768 = vrot.lane.b32.xlu0 %v299, 16
    %v769 = vpop.permute.xlu0 %768
    %770 = vrot.lane.b32.xlu0 %v298, 16
    %v771 = vpop.permute.xlu0 %770
    %772 = vrot.lane.b32.xlu0 %v297, 16
    %v773 = vpop.permute.xlu0 %772
    %774 = vrot.lane.b32.xlu0 %v296, 16
    %v775 = vpop.permute.xlu0 %774
    %776 = vrot.lane.b32.xlu0 %v295, 16
    %v777 = vpop.permute.xlu0 %776
    %778 = vrot.lane.b32.xlu0 %v294, 16
    %v779 = vpop.permute.xlu0 %778
    %780 = vrot.lane.b32.xlu0 %v293, 16
    %v781 = vpop.permute.xlu0 %780
    %782 = vrot.lane.b32.xlu0 %v292, 16
    %v783 = vpop.permute.xlu0 %782
    %784 = vrot.lane.b32.xlu0 %v291, 16
    %v785 = vpop.permute.xlu0 %784
    %786 = vrot.lane.b32.xlu0 %v290, 16
    %v787 = vpop.permute.xlu0 %786
    %788 = vrot.lane.b32.xlu0 %v289, 16
    %v789 = vpop.permute.xlu0 %788
    %790 = vrot.lane.b32.xlu0 %v288, 16
    %v791 = vpop.permute.xlu0 %790
    %792 = vrot.lane.b32.xlu0 %v287, 16
    %v793 = vpop.permute.xlu0 %792
    %794 = vrot.lane.b32.xlu0 %v286, 16
    %v795 = vpop.permute.xlu0 %794
    %796 = vrot.lane.b32.xlu0 %v317, 16
    %v797 = vpop.permute.xlu0 %796
    %vm830 = vcmask 31744
    %v831 = vsel %vm830, %v24, %v351
    %v832 = vsel %vm830, %v25, %v353
    %v833 = vsel %vm830, %v26, %v355
    %v834 = vsel %vm830, %v27, %v357
    %v835 = vsel %vm830, %v28, %v359
    %v836 = vsel %vm830, %v29, %v361
    %v837 = vsel %vm830, %v30, %v363
    %v838 = vsel %vm830, %v31, %v365
    %v839 = vsel %vm830, %v32, %v367
    %v840 = vsel %vm830, %v33, %v369
    %v841 = vsel %vm830, %v34, %v371
    %v842 = vsel %vm830, %v35, %v373
    %v843 = vsel %vm830, %v36, %v375
    %v844 = vsel %vm830, %v37, %v377
    %v845 = vsel %vm830, %v38, %v379
    %v846 = vsel %vm830, %v39, %v381
    %v847 = vsel %vm830, %v40, %v383
    %v848 = vsel %vm830, %v41, %v385
    %v849 = vsel %vm830, %v42, %v387
    %v850 = vsel %vm830, %v43, %v389
    %v851 = vsel %vm830, %v44, %v391
    %v852 = vsel %vm830, %v45, %v393
    %v853 = vsel %vm830, %v46, %v395
    %v854 = vsel %vm830, %v47, %v397
    %v855 = vsel %vm830, %v48, %v399
    %v856 = vsel %vm830, %v49, %v401
    %v857 = vsel %vm830, %v50, %v403
    %v858 = vsel %vm830, %v51, %v405
    %v859 = vsel %vm830, %v52, %v407
    %v860 = vsel %vm830, %v53, %v409
    %v861 = vsel %vm830, %v54, %v411
    %v862 = vsel %vm830, %v55, %v413
    %vm863 = vcmask 64512
    %v864 = vsel %vm863, %v831, %v479
    %v865 = vsel %vm863, %v832, %v481
    %v866 = vsel %vm863, %v833, %v483
    %v867 = vsel %vm863, %v834, %v485
    %v868 = vsel %vm863, %v835, %v487
    %v869 = vsel %vm863, %v836, %v489
    %v870 = vsel %vm863, %v837, %v491
    %v871 = vsel %vm863, %v838, %v493
    %v872 = vsel %vm863, %v839, %v495
    %v873 = vsel %vm863, %v840, %v497
    %v874 = vsel %vm863, %v841, %v499
    %v875 = vsel %vm863, %v842, %v501
    %v876 = vsel %vm863, %v843, %v503
    %v877 = vsel %vm863, %v844, %v505
    %v878 = vsel %vm863, %v845, %v507
    %v879 = vsel %vm863, %v846, %v509
    %v880 = vsel %vm863, %v847, %v511
    %v881 = vsel %vm863, %v848, %v513
    %v882 = vsel %vm863, %v849, %v515
    %v883 = vsel %vm863, %v850, %v517
    %v884 = vsel %vm863, %v851, %v519
    %v885 = vsel %vm863, %v852, %v521
    %v886 = vsel %vm863, %v853, %v523
    %v887 = vsel %vm863, %v854, %v525
    %v888 = vsel %vm863, %v855, %v527
    %v889 = vsel %vm863, %v856, %v529
    %v890 = vsel %vm863, %v857, %v531
    %v891 = vsel %vm863, %v858, %v533
    %v892 = vsel %vm863, %v859, %v535
    %v893 = vsel %vm863, %v860, %v537
    %v894 = vsel %vm863, %v861, %v539
    %v895 = vsel %vm863, %v862, %v541
    %vm896 = vcmask 97280
    %v897 = vsel %vm896, %v864, %v607
    %v898 = vsel %vm896, %v865, %v609
    %v899 = vsel %vm896, %v866, %v611
    %v900 = vsel %vm896, %v867, %v613
    %v901 = vsel %vm896, %v868, %v615
    %v902 = vsel %vm896, %v869, %v617
    %v903 = vsel %vm896, %v870, %v619
    %v904 = vsel %vm896, %v871, %v621
    %v905 = vsel %vm896, %v872, %v623
    %v906 = vsel %vm896, %v873, %v625
    %v907 = vsel %vm896, %v874, %v627
    %v908 = vsel %vm896, %v875, %v629
    %v909 = vsel %vm896, %v876, %v631
    %v910 = vsel %vm896, %v877, %v633
    %v911 = vsel %vm896, %v878, %v635
    %v912 = vsel %vm896, %v879, %v637
    %v913 = vsel %vm896, %v880, %v639
    %v914 = vsel %vm896, %v881, %v641
    %v915 = vsel %vm896, %v882, %v643
    %v916 = vsel %vm896, %v883, %v645
    %v917 = vsel %vm896, %v884, %v647
    %v918 = vsel %vm896, %v885, %v649
    %v919 = vsel %vm896, %v886, %v651
    %v920 = vsel %vm896, %v887, %v653
    %v921 = vsel %vm896, %v888, %v655
    %v922 = vsel %vm896, %v889, %v657
    %v923 = vsel %vm896, %v890, %v659
    %v924 = vsel %vm896, %v891, %v661
    %v925 = vsel %vm896, %v892, %v663
    %v926 = vsel %vm896, %v893, %v665
    %v927 = vsel %vm896, %v894, %v667
    %v928 = vsel %vm896, %v895, %v669
    %vm929 = vcmask 130048
    %v930 = vsel %vm929, %v897, %v735
    %v931 = vsel %vm929, %v898, %v737
    %v932 = vsel %vm929, %v899, %v739
    %v933 = vsel %vm929, %v900, %v741
    %v934 = vsel %vm929, %v901, %v743
    %v935 = vsel %vm929, %v902, %v745
    %v936 = vsel %vm929, %v903, %v747
    %v937 = vsel %vm929, %v904, %v749
    %v938 = vsel %vm929, %v905, %v751
    %v939 = vsel %vm929, %v906, %v753
    %v940 = vsel %vm929, %v907, %v755
    %v941 = vsel %vm929, %v908, %v757
    %v942 = vsel %vm929, %v909, %v759
    %v943 = vsel %vm929, %v910, %v761
    %v944 = vsel %vm929, %v911, %v763
    %v945 = vsel %vm929, %v912, %v765
    %v946 = vsel %vm929, %v913, %v767
    %v947 = vsel %vm929, %v914, %v769
    %v948 = vsel %vm929, %v915, %v771
    %v949 = vsel %vm929, %v916, %v773
    %v950 = vsel %vm929, %v917, %v775
    %v951 = vsel %vm929, %v918, %v777
    %v952 = vsel %vm929, %v919, %v779
    %v953 = vsel %vm929, %v920, %v781
    %v954 = vsel %vm929, %v921, %v783
    %v955 = vsel %vm929, %v922, %v785
    %v956 = vsel %vm929, %v923, %v787
    %v957 = vsel %vm929, %v924, %v789
    %v958 = vsel %vm929, %v925, %v791
    %v959 = vsel %vm929, %v926, %v793
    %v960 = vsel %vm929, %v927, %v795
    %v961 = vsel %vm929, %v928, %v797
    %v962 = vld [vmem:[%s1] sm:$0xff]
    %v963 = vld [vmem:[%s1 + $0x8] sm:$0xff]
    %v964 = vld [vmem:[%s1 + $0x10] sm:$0xf]
    %v965 = vld [vmem:[%s2] sm:$0x1]
    %v967 = vlaneseq
    %v968 = vshrl.u32 %v967, 7
    %v969 = vsub.s32 0, %v968
    %v970 = vrot.slane %v965, %v969
    %vm972 = vcmask 162816
    %v974 = vsel %vm972, %v930, 0
    %v977 = vsel %vm972, %v931, 0
    %v980 = vsel %vm972, %v932, 0
    %v983 = vsel %vm972, %v933, 0
    %v986 = vsel %vm972, %v934, 0
    %v989 = vsel %vm972, %v935, 0
    %v992 = vsel %vm972, %v936, 0
    %v995 = vsel %vm972, %v937, 0
    %v998 = vsel %vm972, %v938, 0
    %v1001 = vsel %vm972, %v939, 0
    %v1004 = vsel %vm972, %v940, 0
    %v1007 = vsel %vm972, %v941, 0
    %v1010 = vsel %vm972, %v942, 0
    %v1013 = vsel %vm972, %v943, 0
    %v1016 = vsel %vm972, %v944, 0
    %v1019 = vsel %vm972, %v945, 0
    %v1022 = vsel %vm972, %v946, 0
    %v1025 = vsel %vm972, %v947, 0
    %v1028 = vsel %vm972, %v948, 0
    %v1031 = vsel %vm972, %v949, 0
    %v1034 = vsel %vm972, %v950, 0
    %v1037 = vsel %vm972, %v951, 0
    %v1040 = vsel %vm972, %v952, 0
    %v1043 = vsel %vm972, %v953, 0
    %v1046 = vsel %vm972, %v954, 0
    %v1049 = vsel %vm972, %v955, 0
    %v1052 = vsel %vm972, %v956, 0
    %v1055 = vsel %vm972, %v957, 0
    %v1058 = vsel %vm972, %v958, 0
    %v1061 = vsel %vm972, %v959, 0
    %v1064 = vsel %vm972, %v960, 0
    %v1067 = vsel %vm972, %v961, 0
    %vm1069 = vcmask 1043456
    %v1071 = vsel %vm1069, %v964, 0
    %1073 = vmatprep.subr.mxu0 0.0
    %1074 = vmatpush1.msra.mxu0 %v962
    %1075 = vmatprep.subr.mxu0 0.0
    %1076 = vmatpush1.msra.mxu0 %v963
    %1077 = vmatprep.subr.mxu0 0.0
    %1078 = vmatpush1.msra.mxu0 %v1071
    %1079 = vmatprep.subr.mxu0 0.0
    %1080 = vmatpush1.msra.mxu0 0.0
    %1081 = vmatprep.subr.mxu0 0.0
    %1082 = vmatpush1.msra.mxu0 0.0
    %1083 = vmatprep.subr.mxu0 0.0
    %1084 = vmatpush1.msra.mxu0 0.0
    %1085 = vmatprep.subr.mxu0 0.0
    %1086 = vmatpush1.msra.mxu0 0.0
    %1087 = vmatprep.subr.mxu0 0.0
    %1088 = vmatpush1.msra.mxu0 0.0
    %1089 = vmatprep.subr.mxu0 0.0
    %1090 = vmatpush1.msra.mxu0 0.0
    %1091 = vmatprep.subr.mxu0 0.0
    %1092 = vmatpush1.msra.mxu0 0.0
    %1093 = vmatprep.subr.mxu0 0.0
    %1094 = vmatpush1.msra.mxu0 0.0
    %1095 = vmatprep.subr.mxu0 0.0
    %1096 = vmatpush1.msra.mxu0 0.0
    %1097 = vmatprep.subr.mxu0 0.0
    %1098 = vmatpush1.msra.mxu0 0.0
    %1099 = vmatprep.subr.mxu0 0.0
    %1100 = vmatpush1.msra.mxu0 0.0
    %1101 = vmatprep.subr.mxu0 0.0
    %1102 = vmatpush1.msra.mxu0 0.0
    %1103 = vmatprep.subr.mxu0 0.0
    %1104 = vmatpush1.msra.mxu0 0.0
    %1105 = vmatprep.subr.mxu0 0.0
    %1106 = vmatpush1.msra.mxu0 0.0
    %1107 = vmatprep.subr.mxu0 0.0
    %1108 = vmatpush1.msra.mxu0 0.0
    %1109 = vmatprep.subr.mxu0 0.0
    %1110 = vmatpush1.msra.mxu0 0.0
    %1111 = vmatprep.subr.mxu0 0.0
    %1112 = vmatpush1.msra.mxu0 0.0
    %1113 = vmatprep.subr.mxu0 0.0
    %1114 = vmatpush1.msra.mxu0 0.0
    %1115 = vmatprep.subr.mxu0 0.0
    %1116 = vmatpush1.msra.mxu0 0.0
    %1117 = vmatprep.subr.mxu0 0.0
    %1118 = vmatpush1.msra.mxu0 0.0
    %1119 = vmatprep.subr.mxu0 0.0
    %1120 = vmatpush1.msra.mxu0 0.0
    %1121 = vmatprep.subr.mxu0 0.0
    %1122 = vmatpush1.msra.mxu0 0.0
    %1123 = vmatprep.subr.mxu0 0.0
    %1124 = vmatpush1.msra.mxu0 0.0
    %1125 = vmatprep.subr.mxu0 0.0
    %1126 = vmatpush1.msra.mxu0 0.0
    %1127 = vmatprep.subr.mxu0 0.0
    %1128 = vmatpush1.msra.mxu0 0.0
    %1129 = vmatprep.subr.mxu0 0.0
    %1130 = vmatpush1.msra.mxu0 0.0
    %1131 = vmatprep.subr.mxu0 0.0
    %1132 = vmatpush1.msra.mxu0 0.0
    %1133 = vmatprep.subr.mxu0 0.0
    %1134 = vmatpush1.msra.mxu0 0.0
    %1135 = vmatprep.subr.mxu0 0.0
    %1136 = vmatpush1.msra.mxu0 0.0
    %1137 = vmatprep.mubr.f32.mxu0 0.0
    %1138 = vmatmul.mubr.f32.gmra.mrb[0].mxu0 %v974
    %v1139 = vpop.f32.mrb[0].mxu0
    %v1140 = vadd.f32 %v970, %v1139
    %v1141 = vpop.f32.mrb[0].mxu0
    %1142 = vmatprep.mubr.f32.mxu0 0.0
    %1143 = vmatmul.mubr.f32.gmra.mrb[0].mxu0 %v977
    %v1144 = vpop.f32.mrb[0].mxu0
    %v1145 = vadd.f32 %v970, %v1144
    %v1146 = vpop.f32.mrb[0].mxu0
    %1147 = vmatprep.mubr.f32.mxu0 0.0
    %1148 = vmatmul.mubr.f32.gmra.mrb[0].mxu0 %v980
    %v1149 = vpop.f32.mrb[0].mxu0
    %v1150 = vadd.f32 %v970, %v1149
    %v1151 = vpop.f32.mrb[0].mxu0
    %1152 = vmatprep.mubr.f32.mxu0 0.0
    %1153 = vmatmul.mubr.f32.gmra.mrb[0].mxu0 %v983
    %v1154 = vpop.f32.mrb[0].mxu0
    %v1155 = vadd.f32 %v970, %v1154
    %v1156 = vpop.f32.mrb[0].mxu0
    %1157 = vmatprep.mubr.f32.mxu0 0.0
    %1158 = vmatmul.mubr.f32.gmra.mrb[0].mxu0 %v986
    %v1159 = vpop.f32.mrb[0].mxu0
    %v1160 = vadd.f32 %v970, %v1159
    %v1161 = vpop.f32.mrb[0].mxu0
    %1162 = vmatprep.mubr.f32.mxu0 0.0
    %1163 = vmatmul.mubr.f32.gmra.mrb[0].mxu0 %v989
    %v1164 = vpop.f32.mrb[0].mxu0
    %v1165 = vadd.f32 %v970, %v1164
    %v1166 = vpop.f32.mrb[0].mxu0
    %1167 = vmatprep.mubr.f32.mxu0 0.0
    %1168 = vmatmul.mubr.f32.gmra.mrb[0].mxu0 %v992
    %v1169 = vpop.f32.mrb[0].mxu0
    %v1170 = vadd.f32 %v970, %v1169
    %v1171 = vpop.f32.mrb[0].mxu0
    %1172 = vmatprep.mubr.f32.mxu0 0.0
    %1173 = vmatmul.mubr.f32.gmra.mrb[0].mxu0 %v995
    %v1174 = vpop.f32.mrb[0].mxu0
    %v1175 = vadd.f32 %v970, %v1174
    %v1176 = vpop.f32.mrb[0].mxu0
    %1177 = vmatprep.mubr.f32.mxu0 0.0
    %1178 = vmatmul.mubr.f32.gmra.mrb[0].mxu0 %v998
    %v1179 = vpop.f32.mrb[0].mxu0
    %v1180 = vadd.f32 %v970, %v1179
    %v1181 = vpop.f32.mrb[0].mxu0
    %1182 = vmatprep.mubr.f32.mxu0 0.0
    %1183 = vmatmul.mubr.f32.gmra.mrb[0].mxu0 %v1001
    %v1184 = vpop.f32.mrb[0].mxu0
    %v1185 = vadd.f32 %v970, %v1184
    %v1186 = vpop.f32.mrb[0].mxu0
    %1187 = vmatprep.mubr.f32.mxu0 0.0
    %1188 = vmatmul.mubr.f32.gmra.mrb[0].mxu0 %v1004
    %v1189 = vpop.f32.mrb[0].mxu0
    %v1190 = vadd.f32 %v970, %v1189
    %v1191 = vpop.f32.mrb[0].mxu0
    %1192 = vmatprep.mubr.f32.mxu0 0.0
    %1193 = vmatmul.mubr.f32.gmra.mrb[0].mxu0 %v1007
    %v1194 = vpop.f32.mrb[0].mxu0
    %v1195 = vadd.f32 %v970, %v1194
    %v1196 = vpop.f32.mrb[0].mxu0
    %1197 = vmatprep.mubr.f32.mxu0 0.0
    %1198 = vmatmul.mubr.f32.gmra.mrb[0].mxu0 %v1010
    %v1199 = vpop.f32.mrb[0].mxu0
    %v1200 = vadd.f32 %v970, %v1199
    %v1201 = vpop.f32.mrb[0].mxu0
    %1202 = vmatprep.mubr.f32.mxu0 0.0
    %1203 = vmatmul.mubr.f32.gmra.mrb[0].mxu0 %v1013
    %v1204 = vpop.f32.mrb[0].mxu0
    %v1205 = vadd.f32 %v970, %v1204
    %v1206 = vpop.f32.mrb[0].mxu0
    %1207 = vmatprep.mubr.f32.mxu0 0.0
    %1208 = vmatmul.mubr.f32.gmra.mrb[0].mxu0 %v1016
    %v1209 = vpop.f32.mrb[0].mxu0
    %v1210 = vadd.f32 %v970, %v1209
    %v1211 = vpop.f32.mrb[0].mxu0
    %1212 = vmatprep.mubr.f32.mxu0 0.0
    %1213 = vmatmul.mubr.f32.gmra.mrb[0].mxu0 %v1019
    %v1214 = vpop.f32.mrb[0].mxu0
    %v1215 = vadd.f32 %v970, %v1214
    %v1216 = vpop.f32.mrb[0].mxu0
    %1217 = vmatprep.mubr.f32.mxu0 0.0
    %1218 = vmatmul.mubr.f32.gmra.mrb[0].mxu0 %v1022
    %v1219 = vpop.f32.mrb[0].mxu0
    %v1220 = vadd.f32 %v970, %v1219
    %v1221 = vpop.f32.mrb[0].mxu0
    %1222 = vmatprep.mubr.f32.mxu0 0.0
    %1223 = vmatmul.mubr.f32.gmra.mrb[0].mxu0 %v1025
    %v1224 = vpop.f32.mrb[0].mxu0
    %v1225 = vadd.f32 %v970, %v1224
    %v1226 = vpop.f32.mrb[0].mxu0
    %1227 = vmatprep.mubr.f32.mxu0 0.0
    %1228 = vmatmul.mubr.f32.gmra.mrb[0].mxu0 %v1028
    %v1229 = vpop.f32.mrb[0].mxu0
    %v1230 = vadd.f32 %v970, %v1229
    %v1231 = vpop.f32.mrb[0].mxu0
    %1232 = vmatprep.mubr.f32.mxu0 0.0
    %1233 = vmatmul.mubr.f32.gmra.mrb[0].mxu0 %v1031
    %v1234 = vpop.f32.mrb[0].mxu0
    %v1235 = vadd.f32 %v970, %v1234
    %v1236 = vpop.f32.mrb[0].mxu0
    %1237 = vmatprep.mubr.f32.mxu0 0.0
    %1238 = vmatmul.mubr.f32.gmra.mrb[0].mxu0 %v1034
    %v1239 = vpop.f32.mrb[0].mxu0
    %v1240 = vadd.f32 %v970, %v1239
    %v1241 = vpop.f32.mrb[0].mxu0
    %1242 = vmatprep.mubr.f32.mxu0 0.0
    %1243 = vmatmul.mubr.f32.gmra.mrb[0].mxu0 %v1037
    %v1244 = vpop.f32.mrb[0].mxu0
    %v1245 = vadd.f32 %v970, %v1244
    %v1246 = vpop.f32.mrb[0].mxu0
    %1247 = vmatprep.mubr.f32.mxu0 0.0
    %1248 = vmatmul.mubr.f32.gmra.mrb[0].mxu0 %v1040
    %v1249 = vpop.f32.mrb[0].mxu0
    %v1250 = vadd.f32 %v970, %v1249
    %v1251 = vpop.f32.mrb[0].mxu0
    %1252 = vmatprep.mubr.f32.mxu0 0.0
    %1253 = vmatmul.mubr.f32.gmra.mrb[0].mxu0 %v1043
    %v1254 = vpop.f32.mrb[0].mxu0
    %v1255 = vadd.f32 %v970, %v1254
    %v1256 = vpop.f32.mrb[0].mxu0
    %1257 = vmatprep.mubr.f32.mxu0 0.0
    %1258 = vmatmul.mubr.f32.gmra.mrb[0].mxu0 %v1046
    %v1259 = vpop.f32.mrb[0].mxu0
    %v1260 = vadd.f32 %v970, %v1259
    %v1261 = vpop.f32.mrb[0].mxu0
    %1262 = vmatprep.mubr.f32.mxu0 0.0
    %1263 = vmatmul.mubr.f32.gmra.mrb[0].mxu0 %v1049
    %v1264 = vpop.f32.mrb[0].mxu0
    %v1265 = vadd.f32 %v970, %v1264
    %v1266 = vpop.f32.mrb[0].mxu0
    %1267 = vmatprep.mubr.f32.mxu0 0.0
    %1268 = vmatmul.mubr.f32.gmra.mrb[0].mxu0 %v1052
    %v1269 = vpop.f32.mrb[0].mxu0
    %v1270 = vadd.f32 %v970, %v1269
    %v1271 = vpop.f32.mrb[0].mxu0
    %1272 = vmatprep.mubr.f32.mxu0 0.0
    %1273 = vmatmul.mubr.f32.gmra.mrb[0].mxu0 %v1055
    %v1274 = vpop.f32.mrb[0].mxu0
    %v1275 = vadd.f32 %v970, %v1274
    %v1276 = vpop.f32.mrb[0].mxu0
    %1277 = vmatprep.mubr.f32.mxu0 0.0
    %1278 = vmatmul.mubr.f32.gmra.mrb[0].mxu0 %v1058
    %v1279 = vpop.f32.mrb[0].mxu0
    %v1280 = vadd.f32 %v970, %v1279
    %v1281 = vpop.f32.mrb[0].mxu0
    %1282 = vmatprep.mubr.f32.mxu0 0.0
    %1283 = vmatmul.mubr.f32.gmra.mrb[0].mxu0 %v1061
    %v1284 = vpop.f32.mrb[0].mxu0
    %v1285 = vadd.f32 %v970, %v1284
    %v1286 = vpop.f32.mrb[0].mxu0
    %1287 = vmatprep.mubr.f32.mxu0 0.0
    %1288 = vmatmul.mubr.f32.gmra.mrb[0].mxu0 %v1064
    %v1289 = vpop.f32.mrb[0].mxu0
    %v1290 = vadd.f32 %v970, %v1289
    %v1291 = vpop.f32.mrb[0].mxu0
    %1292 = vmatprep.mubr.f32.mxu0 0.0
    %1293 = vmatmul.mubr.f32.gmra.mrb[0].mxu0 %v1067
    %v1294 = vpop.f32.mrb[0].mxu0
    %v1295 = vadd.f32 %v970, %v1294
    %v1296 = vpop.f32.mrb[0].mxu0
    %1297 = vdwg.mxu0
    %v1298 = vmax.f32 %v1140, 0.0
    %v1299 = vmax.f32 %v1145, 0.0
    %v1300 = vmax.f32 %v1150, 0.0
    %v1301 = vmax.f32 %v1155, 0.0
    %v1302 = vmax.f32 %v1160, 0.0
    %v1303 = vmax.f32 %v1165, 0.0
    %v1304 = vmax.f32 %v1170, 0.0
    %v1305 = vmax.f32 %v1175, 0.0
    %v1306 = vmax.f32 %v1180, 0.0
    %v1307 = vmax.f32 %v1185, 0.0
    %v1308 = vmax.f32 %v1190, 0.0
    %v1309 = vmax.f32 %v1195, 0.0
    %v1310 = vmax.f32 %v1200, 0.0
    %v1311 = vmax.f32 %v1205, 0.0
    %v1312 = vmax.f32 %v1210, 0.0
    %v1313 = vmax.f32 %v1215, 0.0
    %v1314 = vmax.f32 %v1220, 0.0
    %v1315 = vmax.f32 %v1225, 0.0
    %v1316 = vmax.f32 %v1230, 0.0
    %v1317 = vmax.f32 %v1235, 0.0
    %v1318 = vmax.f32 %v1240, 0.0
    %v1319 = vmax.f32 %v1245, 0.0
    %v1320 = vmax.f32 %v1250, 0.0
    %v1321 = vmax.f32 %v1255, 0.0
    %v1322 = vmax.f32 %v1260, 0.0
    %v1323 = vmax.f32 %v1265, 0.0
    %v1324 = vmax.f32 %v1270, 0.0
    %v1325 = vmax.f32 %v1275, 0.0
    %v1326 = vmax.f32 %v1280, 0.0
    %v1327 = vmax.f32 %v1285, 0.0
    %v1328 = vmax.f32 %v1290, 0.0
    %v1329 = vmax.f32 %v1295, 0.0
    %v1330 = vrot.slane %v1298, 1
    %v1331 = vrot.slane %v1299, 1
    %v1332 = vrot.slane %v1300, 1
    %v1333 = vrot.slane %v1301, 1
    %v1334 = vrot.slane %v1302, 1
    %v1335 = vrot.slane %v1303, 1
    %v1336 = vrot.slane %v1304, 1
    %v1337 = vrot.slane %v1305, 1
    %v1338 = vrot.slane %v1306, 1
    %v1339 = vrot.slane %v1307, 1
    %v1340 = vrot.slane %v1308, 1
    %v1341 = vrot.slane %v1309, 1
    %v1342 = vrot.slane %v1310, 1
    %v1343 = vrot.slane %v1311, 1
    %v1344 = vrot.slane %v1312, 1
    %v1345 = vrot.slane %v1313, 1
    %v1346 = vrot.slane %v1314, 1
    %v1347 = vrot.slane %v1315, 1
    %v1348 = vrot.slane %v1316, 1
    %v1349 = vrot.slane %v1317, 1
    %v1350 = vrot.slane %v1318, 1
    %v1351 = vrot.slane %v1319, 1
    %v1352 = vrot.slane %v1320, 1
    %v1353 = vrot.slane %v1321, 1
    %v1354 = vrot.slane %v1322, 1
    %v1355 = vrot.slane %v1323, 1
    %v1356 = vrot.slane %v1324, 1
    %v1357 = vrot.slane %v1325, 1
    %v1358 = vrot.slane %v1326, 1
    %v1359 = vrot.slane %v1327, 1
    %v1360 = vrot.slane %v1328, 1
    %v1361 = vrot.slane %v1329, 1
    %v1362 = vsel %vm90, %v1360, %v1361
    %v1363 = vsel %vm90, %v1359, %v1360
    %v1364 = vsel %vm90, %v1358, %v1359
    %v1365 = vsel %vm90, %v1357, %v1358
    %v1366 = vsel %vm90, %v1356, %v1357
    %v1367 = vsel %vm90, %v1355, %v1356
    %v1368 = vsel %vm90, %v1354, %v1355
    %v1369 = vsel %vm90, %v1353, %v1354
    %v1370 = vsel %vm90, %v1352, %v1353
    %v1371 = vsel %vm90, %v1351, %v1352
    %v1372 = vsel %vm90, %v1350, %v1351
    %v1373 = vsel %vm90, %v1349, %v1350
    %v1374 = vsel %vm90, %v1348, %v1349
    %v1375 = vsel %vm90, %v1347, %v1348
    %v1376 = vsel %vm90, %v1346, %v1347
    %v1377 = vsel %vm90, %v1345, %v1346
    %v1378 = vsel %vm90, %v1344, %v1345
    %v1379 = vsel %vm90, %v1343, %v1344
    %v1380 = vsel %vm90, %v1342, %v1343
    %v1381 = vsel %vm90, %v1341, %v1342
    %v1382 = vsel %vm90, %v1340, %v1341
    %v1383 = vsel %vm90, %v1339, %v1340
    %v1384 = vsel %vm90, %v1338, %v1339
    %v1385 = vsel %vm90, %v1337, %v1338
    %v1386 = vsel %vm90, %v1336, %v1337
    %v1387 = vsel %vm90, %v1335, %v1336
    %v1388 = vsel %vm90, %v1334, %v1335
    %v1389 = vsel %vm90, %v1333, %v1334
    %v1390 = vsel %vm90, %v1332, %v1333
    %v1391 = vsel %vm90, %v1331, %v1332
    %v1392 = vsel %vm90, %v1330, %v1331
    %v1393 = vsel %vm90, %v1361, %v1330
    %v1394 = vrot.slane %v1298, 2
    %v1395 = vrot.slane %v1299, 2
    %v1396 = vrot.slane %v1300, 2
    %v1397 = vrot.slane %v1301, 2
    %v1398 = vrot.slane %v1302, 2
    %v1399 = vrot.slane %v1303, 2
    %v1400 = vrot.slane %v1304, 2
    %v1401 = vrot.slane %v1305, 2
    %v1402 = vrot.slane %v1306, 2
    %v1403 = vrot.slane %v1307, 2
    %v1404 = vrot.slane %v1308, 2
    %v1405 = vrot.slane %v1309, 2
    %v1406 = vrot.slane %v1310, 2
    %v1407 = vrot.slane %v1311, 2
    %v1408 = vrot.slane %v1312, 2
    %v1409 = vrot.slane %v1313, 2
    %v1410 = vrot.slane %v1314, 2
    %v1411 = vrot.slane %v1315, 2
    %v1412 = vrot.slane %v1316, 2
    %v1413 = vrot.slane %v1317, 2
    %v1414 = vrot.slane %v1318, 2
    %v1415 = vrot.slane %v1319, 2
    %v1416 = vrot.slane %v1320, 2
    %v1417 = vrot.slane %v1321, 2
    %v1418 = vrot.slane %v1322, 2
    %v1419 = vrot.slane %v1323, 2
    %v1420 = vrot.slane %v1324, 2
    %v1421 = vrot.slane %v1325, 2
    %v1422 = vrot.slane %v1326, 2
    %v1423 = vrot.slane %v1327, 2
    %v1424 = vrot.slane %v1328, 2
    %v1425 = vrot.slane %v1329, 2
    %v1426 = vsel %vm155, %v1424, %v1425
    %v1427 = vsel %vm155, %v1423, %v1424
    %v1428 = vsel %vm155, %v1422, %v1423
    %v1429 = vsel %vm155, %v1421, %v1422
    %v1430 = vsel %vm155, %v1420, %v1421
    %v1431 = vsel %vm155, %v1419, %v1420
    %v1432 = vsel %vm155, %v1418, %v1419
    %v1433 = vsel %vm155, %v1417, %v1418
    %v1434 = vsel %vm155, %v1416, %v1417
    %v1435 = vsel %vm155, %v1415, %v1416
    %v1436 = vsel %vm155, %v1414, %v1415
    %v1437 = vsel %vm155, %v1413, %v1414
    %v1438 = vsel %vm155, %v1412, %v1413
    %v1439 = vsel %vm155, %v1411, %v1412
    %v1440 = vsel %vm155, %v1410, %v1411
    %v1441 = vsel %vm155, %v1409, %v1410
    %v1442 = vsel %vm155, %v1408, %v1409
    %v1443 = vsel %vm155, %v1407, %v1408
    %v1444 = vsel %vm155, %v1406, %v1407
    %v1445 = vsel %vm155, %v1405, %v1406
    %v1446 = vsel %vm155, %v1404, %v1405
    %v1447 = vsel %vm155, %v1403, %v1404
    %v1448 = vsel %vm155, %v1402, %v1403
    %v1449 = vsel %vm155, %v1401, %v1402
    %v1450 = vsel %vm155, %v1400, %v1401
    %v1451 = vsel %vm155, %v1399, %v1400
    %v1452 = vsel %vm155, %v1398, %v1399
    %v1453 = vsel %vm155, %v1397, %v1398
    %v1454 = vsel %vm155, %v1396, %v1397
    %v1455 = vsel %vm155, %v1395, %v1396
    %v1456 = vsel %vm155, %v1394, %v1395
    %v1457 = vsel %vm155, %v1425, %v1394
    %v1458 = vrot.slane %v1298, 3
    %v1459 = vrot.slane %v1299, 3
    %v1460 = vrot.slane %v1300, 3
    %v1461 = vrot.slane %v1301, 3
    %v1462 = vrot.slane %v1302, 3
    %v1463 = vrot.slane %v1303, 3
    %v1464 = vrot.slane %v1304, 3
    %v1465 = vrot.slane %v1305, 3
    %v1466 = vrot.slane %v1306, 3
    %v1467 = vrot.slane %v1307, 3
    %v1468 = vrot.slane %v1308, 3
    %v1469 = vrot.slane %v1309, 3
    %v1470 = vrot.slane %v1310, 3
    %v1471 = vrot.slane %v1311, 3
    %v1472 = vrot.slane %v1312, 3
    %v1473 = vrot.slane %v1313, 3
    %v1474 = vrot.slane %v1314, 3
    %v1475 = vrot.slane %v1315, 3
    %v1476 = vrot.slane %v1316, 3
    %v1477 = vrot.slane %v1317, 3
    %v1478 = vrot.slane %v1318, 3
    %v1479 = vrot.slane %v1319, 3
    %v1480 = vrot.slane %v1320, 3
    %v1481 = vrot.slane %v1321, 3
    %v1482 = vrot.slane %v1322, 3
    %v1483 = vrot.slane %v1323, 3
    %v1484 = vrot.slane %v1324, 3
    %v1485 = vrot.slane %v1325, 3
    %v1486 = vrot.slane %v1326, 3
    %v1487 = vrot.slane %v1327, 3
    %v1488 = vrot.slane %v1328, 3
    %v1489 = vrot.slane %v1329, 3
    %v1490 = vsel %vm220, %v1488, %v1489
    %v1491 = vsel %vm220, %v1487, %v1488
    %v1492 = vsel %vm220, %v1486, %v1487
    %v1493 = vsel %vm220, %v1485, %v1486
    %v1494 = vsel %vm220, %v1484, %v1485
    %v1495 = vsel %vm220, %v1483, %v1484
    %v1496 = vsel %vm220, %v1482, %v1483
    %v1497 = vsel %vm220, %v1481, %v1482
    %v1498 = vsel %vm220, %v1480, %v1481
    %v1499 = vsel %vm220, %v1479, %v1480
    %v1500 = vsel %vm220, %v1478, %v1479
    %v1501 = vsel %vm220, %v1477, %v1478
    %v1502 = vsel %vm220, %v1476, %v1477
    %v1503 = vsel %vm220, %v1475, %v1476
    %v1504 = vsel %vm220, %v1474, %v1475
    %v1505 = vsel %vm220, %v1473, %v1474
    %v1506 = vsel %vm220, %v1472, %v1473
    %v1507 = vsel %vm220, %v1471, %v1472
    %v1508 = vsel %vm220, %v1470, %v1471
    %v1509 = vsel %vm220, %v1469, %v1470
    %v1510 = vsel %vm220, %v1468, %v1469
    %v1511 = vsel %vm220, %v1467, %v1468
    %v1512 = vsel %vm220, %v1466, %v1467
    %v1513 = vsel %vm220, %v1465, %v1466
    %v1514 = vsel %vm220, %v1464, %v1465
    %v1515 = vsel %vm220, %v1463, %v1464
    %v1516 = vsel %vm220, %v1462, %v1463
    %v1517 = vsel %vm220, %v1461, %v1462
    %v1518 = vsel %vm220, %v1460, %v1461
    %v1519 = vsel %vm220, %v1459, %v1460
    %v1520 = vsel %vm220, %v1458, %v1459
    %v1521 = vsel %vm220, %v1489, %v1458
    %v1522 = vrot.slane %v1298, 4
    %v1523 = vrot.slane %v1299, 4
    %v1524 = vrot.slane %v1300, 4
    %v1525 = vrot.slane %v1301, 4
    %v1526 = vrot.slane %v1302, 4
    %v1527 = vrot.slane %v1303, 4
    %v1528 = vrot.slane %v1304, 4
    %v1529 = vrot.slane %v1305, 4
    %v1530 = vrot.slane %v1306, 4
    %v1531 = vrot.slane %v1307, 4
    %v1532 = vrot.slane %v1308, 4
    %v1533 = vrot.slane %v1309, 4
    %v1534 = vrot.slane %v1310, 4
    %v1535 = vrot.slane %v1311, 4
    %v1536 = vrot.slane %v1312, 4
    %v1537 = vrot.slane %v1313, 4
    %v1538 = vrot.slane %v1314, 4
    %v1539 = vrot.slane %v1315, 4
    %v1540 = vrot.slane %v1316, 4
    %v1541 = vrot.slane %v1317, 4
    %v1542 = vrot.slane %v1318, 4
    %v1543 = vrot.slane %v1319, 4
    %v1544 = vrot.slane %v1320, 4
    %v1545 = vrot.slane %v1321, 4
    %v1546 = vrot.slane %v1322, 4
    %v1547 = vrot.slane %v1323, 4
    %v1548 = vrot.slane %v1324, 4
    %v1549 = vrot.slane %v1325, 4
    %v1550 = vrot.slane %v1326, 4
    %v1551 = vrot.slane %v1327, 4
    %v1552 = vrot.slane %v1328, 4
    %v1553 = vrot.slane %v1329, 4
    %v1554 = vsel %vm285, %v1552, %v1553
    %v1555 = vsel %vm285, %v1551, %v1552
    %v1556 = vsel %vm285, %v1550, %v1551
    %v1557 = vsel %vm285, %v1549, %v1550
    %v1558 = vsel %vm285, %v1548, %v1549
    %v1559 = vsel %vm285, %v1547, %v1548
    %v1560 = vsel %vm285, %v1546, %v1547
    %v1561 = vsel %vm285, %v1545, %v1546
    %v1562 = vsel %vm285, %v1544, %v1545
    %v1563 = vsel %vm285, %v1543, %v1544
    %v1564 = vsel %vm285, %v1542, %v1543
    %v1565 = vsel %vm285, %v1541, %v1542
    %v1566 = vsel %vm285, %v1540, %v1541
    %v1567 = vsel %vm285, %v1539, %v1540
    %v1568 = vsel %vm285, %v1538, %v1539
    %v1569 = vsel %vm285, %v1537, %v1538
    %v1570 = vsel %vm285, %v1536, %v1537
    %v1571 = vsel %vm285, %v1535, %v1536
    %v1572 = vsel %vm285, %v1534, %v1535
    %v1573 = vsel %vm285, %v1533, %v1534
    %v1574 = vsel %vm285, %v1532, %v1533
    %v1575 = vsel %vm285, %v1531, %v1532
    %v1576 = vsel %vm285, %v1530, %v1531
    %v1577 = vsel %vm285, %v1529, %v1530
    %v1578 = vsel %vm285, %v1528, %v1529
    %v1579 = vsel %vm285, %v1527, %v1528
    %v1580 = vsel %vm285, %v1526, %v1527
    %v1581 = vsel %vm285, %v1525, %v1526
    %v1582 = vsel %vm285, %v1524, %v1525
    %v1583 = vsel %vm285, %v1523, %v1524
    %v1584 = vsel %vm285, %v1522, %v1523
    %v1585 = vsel %vm285, %v1553, %v1522
    %1618 = vrot.lane.b32.xlu0 %v1392, 16
    %v1619 = vpop.permute.xlu0 %1618
    %1620 = vrot.lane.b32.xlu0 %v1391, 16
    %v1621 = vpop.permute.xlu0 %1620
    %1622 = vrot.lane.b32.xlu0 %v1390, 16
    %v1623 = vpop.permute.xlu0 %1622
    %1624 = vrot.lane.b32.xlu0 %v1389, 16
    %v1625 = vpop.permute.xlu0 %1624
    %1626 = vrot.lane.b32.xlu0 %v1388, 16
    %v1627 = vpop.permute.xlu0 %1626
    %1628 = vrot.lane.b32.xlu0 %v1387, 16
    %v1629 = vpop.permute.xlu0 %1628
    %1630 = vrot.lane.b32.xlu0 %v1386, 16
    %v1631 = vpop.permute.xlu0 %1630
    %1632 = vrot.lane.b32.xlu0 %v1385, 16
    %v1633 = vpop.permute.xlu0 %1632
    %1634 = vrot.lane.b32.xlu0 %v1384, 16
    %v1635 = vpop.permute.xlu0 %1634
    %1636 = vrot.lane.b32.xlu0 %v1383, 16
    %v1637 = vpop.permute.xlu0 %1636
    %1638 = vrot.lane.b32.xlu0 %v1382, 16
    %v1639 = vpop.permute.xlu0 %1638
    %1640 = vrot.lane.b32.xlu0 %v1381, 16
    %v1641 = vpop.permute.xlu0 %1640
    %1642 = vrot.lane.b32.xlu0 %v1380, 16
    %v1643 = vpop.permute.xlu0 %1642
    %1644 = vrot.lane.b32.xlu0 %v1379, 16
    %v1645 = vpop.permute.xlu0 %1644
    %1646 = vrot.lane.b32.xlu0 %v1378, 16
    %v1647 = vpop.permute.xlu0 %1646
    %1648 = vrot.lane.b32.xlu0 %v1377, 16
    %v1649 = vpop.permute.xlu0 %1648
    %1650 = vrot.lane.b32.xlu0 %v1376, 16
    %v1651 = vpop.permute.xlu0 %1650
    %1652 = vrot.lane.b32.xlu0 %v1375, 16
    %v1653 = vpop.permute.xlu0 %1652
    %1654 = vrot.lane.b32.xlu0 %v1374, 16
    %v1655 = vpop.permute.xlu0 %1654
    %1656 = vrot.lane.b32.xlu0 %v1373, 16
    %v1657 = vpop.permute.xlu0 %1656
    %1658 = vrot.lane.b32.xlu0 %v1372, 16
    %v1659 = vpop.permute.xlu0 %1658
    %1660 = vrot.lane.b32.xlu0 %v1371, 16
    %v1661 = vpop.permute.xlu0 %1660
    %1662 = vrot.lane.b32.xlu0 %v1370, 16
    %v1663 = vpop.permute.xlu0 %1662
    %1664 = vrot.lane.b32.xlu0 %v1369, 16
    %v1665 = vpop.permute.xlu0 %1664
    %1666 = vrot.lane.b32.xlu0 %v1368, 16
    %v1667 = vpop.permute.xlu0 %1666
    %1668 = vrot.lane.b32.xlu0 %v1367, 16
    %v1669 = vpop.permute.xlu0 %1668
    %1670 = vrot.lane.b32.xlu0 %v1366, 16
    %v1671 = vpop.permute.xlu0 %1670
    %1672 = vrot.lane.b32.xlu0 %v1365, 16
    %v1673 = vpop.permute.xlu0 %1672
    %1674 = vrot.lane.b32.xlu0 %v1364, 16
    %v1675 = vpop.permute.xlu0 %1674
    %1676 = vrot.lane.b32.xlu0 %v1363, 16
    %v1677 = vpop.permute.xlu0 %1676
    %1678 = vrot.lane.b32.xlu0 %v1362, 16
    %v1679 = vpop.permute.xlu0 %1678
    %1680 = vrot.lane.b32.xlu0 %v1393, 16
    %v1681 = vpop.permute.xlu0 %1680
    %1746 = vrot.lane.b32.xlu0 %v1456, 32
    %v1747 = vpop.permute.xlu0 %1746
    %1748 = vrot.lane.b32.xlu0 %v1455, 32
    %v1749 = vpop.permute.xlu0 %1748
    %1750 = vrot.lane.b32.xlu0 %v1454, 32
    %v1751 = vpop.permute.xlu0 %1750
    %1752 = vrot.lane.b32.xlu0 %v1453, 32
    %v1753 = vpop.permute.xlu0 %1752
    %1754 = vrot.lane.b32.xlu0 %v1452, 32
    %v1755 = vpop.permute.xlu0 %1754
    %1756 = vrot.lane.b32.xlu0 %v1451, 32
    %v1757 = vpop.permute.xlu0 %1756
    %1758 = vrot.lane.b32.xlu0 %v1450, 32
    %v1759 = vpop.permute.xlu0 %1758
    %1760 = vrot.lane.b32.xlu0 %v1449, 32
    %v1761 = vpop.permute.xlu0 %1760
    %1762 = vrot.lane.b32.xlu0 %v1448, 32
    %v1763 = vpop.permute.xlu0 %1762
    %1764 = vrot.lane.b32.xlu0 %v1447, 32
    %v1765 = vpop.permute.xlu0 %1764
    %1766 = vrot.lane.b32.xlu0 %v1446, 32
    %v1767 = vpop.permute.xlu0 %1766
    %1768 = vrot.lane.b32.xlu0 %v1445, 32
    %v1769 = vpop.permute.xlu0 %1768
    %1770 = vrot.lane.b32.xlu0 %v1444, 32
    %v1771 = vpop.permute.xlu0 %1770
    %1772 = vrot.lane.b32.xlu0 %v1443, 32
    %v1773 = vpop.permute.xlu0 %1772
    %1774 = vrot.lane.b32.xlu0 %v1442, 32
    %v1775 = vpop.permute.xlu0 %1774
    %1776 = vrot.lane.b32.xlu0 %v1441, 32
    %v1777 = vpop.permute.xlu0 %1776
    %1778 = vrot.lane.b32.xlu0 %v1440, 32
    %v1779 = vpop.permute.xlu0 %1778
    %1780 = vrot.lane.b32.xlu0 %v1439, 32
    %v1781 = vpop.permute.xlu0 %1780
    %1782 = vrot.lane.b32.xlu0 %v1438, 32
    %v1783 = vpop.permute.xlu0 %1782
    %1784 = vrot.lane.b32.xlu0 %v1437, 32
    %v1785 = vpop.permute.xlu0 %1784
    %1786 = vrot.lane.b32.xlu0 %v1436, 32
    %v1787 = vpop.permute.xlu0 %1786
    %1788 = vrot.lane.b32.xlu0 %v1435, 32
    %v1789 = vpop.permute.xlu0 %1788
    %1790 = vrot.lane.b32.xlu0 %v1434, 32
    %v1791 = vpop.permute.xlu0 %1790
    %1792 = vrot.lane.b32.xlu0 %v1433, 32
    %v1793 = vpop.permute.xlu0 %1792
    %1794 = vrot.lane.b32.xlu0 %v1432, 32
    %v1795 = vpop.permute.xlu0 %1794
    %1796 = vrot.lane.b32.xlu0 %v1431, 32
    %v1797 = vpop.permute.xlu0 %1796
    %1798 = vrot.lane.b32.xlu0 %v1430, 32
    %v1799 = vpop.permute.xlu0 %1798
    %1800 = vrot.lane.b32.xlu0 %v1429, 32
    %v1801 = vpop.permute.xlu0 %1800
    %1802 = vrot.lane.b32.xlu0 %v1428, 32
    %v1803 = vpop.permute.xlu0 %1802
    %1804 = vrot.lane.b32.xlu0 %v1427, 32
    %v1805 = vpop.permute.xlu0 %1804
    %1806 = vrot.lane.b32.xlu0 %v1426, 32
    %v1807 = vpop.permute.xlu0 %1806
    %1808 = vrot.lane.b32.xlu0 %v1457, 32
    %v1809 = vpop.permute.xlu0 %1808
    %1874 = vrot.lane.b32.xlu0 %v1520, 48
    %v1875 = vpop.permute.xlu0 %1874
    %1876 = vrot.lane.b32.xlu0 %v1519, 48
    %v1877 = vpop.permute.xlu0 %1876
    %1878 = vrot.lane.b32.xlu0 %v1518, 48
    %v1879 = vpop.permute.xlu0 %1878
    %1880 = vrot.lane.b32.xlu0 %v1517, 48
    %v1881 = vpop.permute.xlu0 %1880
    %1882 = vrot.lane.b32.xlu0 %v1516, 48
    %v1883 = vpop.permute.xlu0 %1882
    %1884 = vrot.lane.b32.xlu0 %v1515, 48
    %v1885 = vpop.permute.xlu0 %1884
    %1886 = vrot.lane.b32.xlu0 %v1514, 48
    %v1887 = vpop.permute.xlu0 %1886
    %1888 = vrot.lane.b32.xlu0 %v1513, 48
    %v1889 = vpop.permute.xlu0 %1888
    %1890 = vrot.lane.b32.xlu0 %v1512, 48
    %v1891 = vpop.permute.xlu0 %1890
    %1892 = vrot.lane.b32.xlu0 %v1511, 48
    %v1893 = vpop.permute.xlu0 %1892
    %1894 = vrot.lane.b32.xlu0 %v1510, 48
    %v1895 = vpop.permute.xlu0 %1894
    %1896 = vrot.lane.b32.xlu0 %v1509, 48
    %v1897 = vpop.permute.xlu0 %1896
    %1898 = vrot.lane.b32.xlu0 %v1508, 48
    %v1899 = vpop.permute.xlu0 %1898
    %1900 = vrot.lane.b32.xlu0 %v1507, 48
    %v1901 = vpop.permute.xlu0 %1900
    %1902 = vrot.lane.b32.xlu0 %v1506, 48
    %v1903 = vpop.permute.xlu0 %1902
    %1904 = vrot.lane.b32.xlu0 %v1505, 48
    %v1905 = vpop.permute.xlu0 %1904
    %1906 = vrot.lane.b32.xlu0 %v1504, 48
    %v1907 = vpop.permute.xlu0 %1906
    %1908 = vrot.lane.b32.xlu0 %v1503, 48
    %v1909 = vpop.permute.xlu0 %1908
    %1910 = vrot.lane.b32.xlu0 %v1502, 48
    %v1911 = vpop.permute.xlu0 %1910
    %1912 = vrot.lane.b32.xlu0 %v1501, 48
    %v1913 = vpop.permute.xlu0 %1912
    %1914 = vrot.lane.b32.xlu0 %v1500, 48
    %v1915 = vpop.permute.xlu0 %1914
    %1916 = vrot.lane.b32.xlu0 %v1499, 48
    %v1917 = vpop.permute.xlu0 %1916
    %1918 = vrot.lane.b32.xlu0 %v1498, 48
    %v1919 = vpop.permute.xlu0 %1918
    %1920 = vrot.lane.b32.xlu0 %v1497, 48
    %v1921 = vpop.permute.xlu0 %1920
    %1922 = vrot.lane.b32.xlu0 %v1496, 48
    %v1923 = vpop.permute.xlu0 %1922
    %1924 = vrot.lane.b32.xlu0 %v1495, 48
    %v1925 = vpop.permute.xlu0 %1924
    %1926 = vrot.lane.b32.xlu0 %v1494, 48
    %v1927 = vpop.permute.xlu0 %1926
    %1928 = vrot.lane.b32.xlu0 %v1493, 48
    %v1929 = vpop.permute.xlu0 %1928
    %1930 = vrot.lane.b32.xlu0 %v1492, 48
    %v1931 = vpop.permute.xlu0 %1930
    %1932 = vrot.lane.b32.xlu0 %v1491, 48
    %v1933 = vpop.permute.xlu0 %1932
    %1934 = vrot.lane.b32.xlu0 %v1490, 48
    %v1935 = vpop.permute.xlu0 %1934
    %1936 = vrot.lane.b32.xlu0 %v1521, 48
    %v1937 = vpop.permute.xlu0 %1936
    %2002 = vrot.lane.b32.xlu0 %v1584, 64
    %v2003 = vpop.permute.xlu0 %2002
    %2004 = vrot.lane.b32.xlu0 %v1583, 64
    %v2005 = vpop.permute.xlu0 %2004
    %2006 = vrot.lane.b32.xlu0 %v1582, 64
    %v2007 = vpop.permute.xlu0 %2006
    %2008 = vrot.lane.b32.xlu0 %v1581, 64
    %v2009 = vpop.permute.xlu0 %2008
    %2010 = vrot.lane.b32.xlu0 %v1580, 64
    %v2011 = vpop.permute.xlu0 %2010
    %2012 = vrot.lane.b32.xlu0 %v1579, 64
    %v2013 = vpop.permute.xlu0 %2012
    %2014 = vrot.lane.b32.xlu0 %v1578, 64
    %v2015 = vpop.permute.xlu0 %2014
    %2016 = vrot.lane.b32.xlu0 %v1577, 64
    %v2017 = vpop.permute.xlu0 %2016
    %2018 = vrot.lane.b32.xlu0 %v1576, 64
    %v2019 = vpop.permute.xlu0 %2018
    %2020 = vrot.lane.b32.xlu0 %v1575, 64
    %v2021 = vpop.permute.xlu0 %2020
    %2022 = vrot.lane.b32.xlu0 %v1574, 64
    %v2023 = vpop.permute.xlu0 %2022
    %2024 = vrot.lane.b32.xlu0 %v1573, 64
    %v2025 = vpop.permute.xlu0 %2024
    %2026 = vrot.lane.b32.xlu0 %v1572, 64
    %v2027 = vpop.permute.xlu0 %2026
    %2028 = vrot.lane.b32.xlu0 %v1571, 64
    %v2029 = vpop.permute.xlu0 %2028
    %2030 = vrot.lane.b32.xlu0 %v1570, 64
    %v2031 = vpop.permute.xlu0 %2030
    %2032 = vrot.lane.b32.xlu0 %v1569, 64
    %v2033 = vpop.permute.xlu0 %2032
    %2034 = vrot.lane.b32.xlu0 %v1568, 64
    %v2035 = vpop.permute.xlu0 %2034
    %2036 = vrot.lane.b32.xlu0 %v1567, 64
    %v2037 = vpop.permute.xlu0 %2036
    %2038 = vrot.lane.b32.xlu0 %v1566, 64
    %v2039 = vpop.permute.xlu0 %2038
    %2040 = vrot.lane.b32.xlu0 %v1565, 64
    %v2041 = vpop.permute.xlu0 %2040
    %2042 = vrot.lane.b32.xlu0 %v1564, 64
    %v2043 = vpop.permute.xlu0 %2042
    %2044 = vrot.lane.b32.xlu0 %v1563, 64
    %v2045 = vpop.permute.xlu0 %2044
    %2046 = vrot.lane.b32.xlu0 %v1562, 64
    %v2047 = vpop.permute.xlu0 %2046
    %2048 = vrot.lane.b32.xlu0 %v1561, 64
    %v2049 = vpop.permute.xlu0 %2048
    %2050 = vrot.lane.b32.xlu0 %v1560, 64
    %v2051 = vpop.permute.xlu0 %2050
    %2052 = vrot.lane.b32.xlu0 %v1559, 64
    %v2053 = vpop.permute.xlu0 %2052
    %2054 = vrot.lane.b32.xlu0 %v1558, 64
    %v2055 = vpop.permute.xlu0 %2054
    %2056 = vrot.lane.b32.xlu0 %v1557, 64
    %v2057 = vpop.permute.xlu0 %2056
    %2058 = vrot.lane.b32.xlu0 %v1556, 64
    %v2059 = vpop.permute.xlu0 %2058
    %2060 = vrot.lane.b32.xlu0 %v1555, 64
    %v2061 = vpop.permute.xlu0 %2060
    %2062 = vrot.lane.b32.xlu0 %v1554, 64
    %v2063 = vpop.permute.xlu0 %2062
    %2064 = vrot.lane.b32.xlu0 %v1585, 64
    %v2065 = vpop.permute.xlu0 %2064
    %v2098 = vsel %vm929, %v1298, %v1619
    %v2099 = vsel %vm929, %v1299, %v1621
    %v2100 = vsel %vm929, %v1300, %v1623
    %v2101 = vsel %vm929, %v1301, %v1625
    %v2102 = vsel %vm929, %v1302, %v1627
    %v2103 = vsel %vm929, %v1303, %v1629
    %v2104 = vsel %vm929, %v1304, %v1631
    %v2105 = vsel %vm929, %v1305, %v1633
    %v2106 = vsel %vm929, %v1306, %v1635
    %v2107 = vsel %vm929, %v1307, %v1637
    %v2108 = vsel %vm929, %v1308, %v1639
    %v2109 = vsel %vm929, %v1309, %v1641
    %v2110 = vsel %vm929, %v1310, %v1643
    %v2111 = vsel %vm929, %v1311, %v1645
    %v2112 = vsel %vm929, %v1312, %v1647
    %v2113 = vsel %vm929, %v1313, %v1649
    %v2114 = vsel %vm929, %v1314, %v1651
    %v2115 = vsel %vm929, %v1315, %v1653
    %v2116 = vsel %vm929, %v1316, %v1655
    %v2117 = vsel %vm929, %v1317, %v1657
    %v2118 = vsel %vm929, %v1318, %v1659
    %v2119 = vsel %vm929, %v1319, %v1661
    %v2120 = vsel %vm929, %v1320, %v1663
    %v2121 = vsel %vm929, %v1321, %v1665
    %v2122 = vsel %vm929, %v1322, %v1667
    %v2123 = vsel %vm929, %v1323, %v1669
    %v2124 = vsel %vm929, %v1324, %v1671
    %v2125 = vsel %vm929, %v1325, %v1673
    %v2126 = vsel %vm929, %v1326, %v1675
    %v2127 = vsel %vm929, %v1327, %v1677
    %v2128 = vsel %vm929, %v1328, %v1679
    %v2129 = vsel %vm929, %v1329, %v1681
    %vm2130 = vcmask 261120
    %v2131 = vsel %vm2130, %v2098, %v1747
    %v2132 = vsel %vm2130, %v2099, %v1749
    %v2133 = vsel %vm2130, %v2100, %v1751
    %v2134 = vsel %vm2130, %v2101, %v1753
    %v2135 = vsel %vm2130, %v2102, %v1755
    %v2136 = vsel %vm2130, %v2103, %v1757
    %v2137 = vsel %vm2130, %v2104, %v1759
    %v2138 = vsel %vm2130, %v2105, %v1761
    %v2139 = vsel %vm2130, %v2106, %v1763
    %v2140 = vsel %vm2130, %v2107, %v1765
    %v2141 = vsel %vm2130, %v2108, %v1767
    %v2142 = vsel %vm2130, %v2109, %v1769
    %v2143 = vsel %vm2130, %v2110, %v1771
    %v2144 = vsel %vm2130, %v2111, %v1773
    %v2145 = vsel %vm2130, %v2112, %v1775
    %v2146 = vsel %vm2130, %v2113, %v1777
    %v2147 = vsel %vm2130, %v2114, %v1779
    %v2148 = vsel %vm2130, %v2115, %v1781
    %v2149 = vsel %vm2130, %v2116, %v1783
    %v2150 = vsel %vm2130, %v2117, %v1785
    %v2151 = vsel %vm2130, %v2118, %v1787
    %v2152 = vsel %vm2130, %v2119, %v1789
    %v2153 = vsel %vm2130, %v2120, %v1791
    %v2154 = vsel %vm2130, %v2121, %v1793
    %v2155 = vsel %vm2130, %v2122, %v1795
    %v2156 = vsel %vm2130, %v2123, %v1797
    %v2157 = vsel %vm2130, %v2124, %v1799
    %v2158 = vsel %vm2130, %v2125, %v1801
    %v2159 = vsel %vm2130, %v2126, %v1803
    %v2160 = vsel %vm2130, %v2127, %v1805
    %v2161 = vsel %vm2130, %v2128, %v1807
    %v2162 = vsel %vm2130, %v2129, %v1809
    %vm2163 = vcmask 392192
    %v2164 = vsel %vm2163, %v2131, %v1875
    %v2165 = vsel %vm2163, %v2132, %v1877
    %v2166 = vsel %vm2163, %v2133, %v1879
    %v2167 = vsel %vm2163, %v2134, %v1881
    %v2168 = vsel %vm2163, %v2135, %v1883
    %v2169 = vsel %vm2163, %v2136, %v1885
    %v2170 = vsel %vm2163, %v2137, %v1887
    %v2171 = vsel %vm2163, %v2138, %v1889
    %v2172 = vsel %vm2163, %v2139, %v1891
    %v2173 = vsel %vm2163, %v2140, %v1893
    %v2174 = vsel %vm2163, %v2141, %v1895
    %v2175 = vsel %vm2163, %v2142, %v1897
    %v2176 = vsel %vm2163, %v2143, %v1899
    %v2177 = vsel %vm2163, %v2144, %v1901
    %v2178 = vsel %vm2163, %v2145, %v1903
    %v2179 = vsel %vm2163, %v2146, %v1905
    %v2180 = vsel %vm2163, %v2147, %v1907
    %v2181 = vsel %vm2163, %v2148, %v1909
    %v2182 = vsel %vm2163, %v2149, %v1911
    %v2183 = vsel %vm2163, %v2150, %v1913
    %v2184 = vsel %vm2163, %v2151, %v1915
    %v2185 = vsel %vm2163, %v2152, %v1917
    %v2186 = vsel %vm2163, %v2153, %v1919
    %v2187 = vsel %vm2163, %v2154, %v1921
    %v2188 = vsel %vm2163, %v2155, %v1923
    %v2189 = vsel %vm2163, %v2156, %v1925
    %v2190 = vsel %vm2163, %v2157, %v1927
    %v2191 = vsel %vm2163, %v2158, %v1929
    %v2192 = vsel %vm2163, %v2159, %v1931
    %v2193 = vsel %vm2163, %v2160, %v1933
    %v2194 = vsel %vm2163, %v2161, %v1935
    %v2195 = vsel %vm2163, %v2162, %v1937
    %vm2196 = vcmask 523264
    %v2197 = vsel %vm2196, %v2164, %v2003
    %v2198 = vsel %vm2196, %v2165, %v2005
    %v2199 = vsel %vm2196, %v2166, %v2007
    %v2200 = vsel %vm2196, %v2167, %v2009
    %v2201 = vsel %vm2196, %v2168, %v2011
    %v2202 = vsel %vm2196, %v2169, %v2013
    %v2203 = vsel %vm2196, %v2170, %v2015
    %v2204 = vsel %vm2196, %v2171, %v2017
    %v2205 = vsel %vm2196, %v2172, %v2019
    %v2206 = vsel %vm2196, %v2173, %v2021
    %v2207 = vsel %vm2196, %v2174, %v2023
    %v2208 = vsel %vm2196, %v2175, %v2025
    %v2209 = vsel %vm2196, %v2176, %v2027
    %v2210 = vsel %vm2196, %v2177, %v2029
    %v2211 = vsel %vm2196, %v2178, %v2031
    %v2212 = vsel %vm2196, %v2179, %v2033
    %v2213 = vsel %vm2196, %v2180, %v2035
    %v2214 = vsel %vm2196, %v2181, %v2037
    %v2215 = vsel %vm2196, %v2182, %v2039
    %v2216 = vsel %vm2196, %v2183, %v2041
    %v2217 = vsel %vm2196, %v2184, %v2043
    %v2218 = vsel %vm2196, %v2185, %v2045
    %v2219 = vsel %vm2196, %v2186, %v2047
    %v2220 = vsel %vm2196, %v2187, %v2049
    %v2221 = vsel %vm2196, %v2188, %v2051
    %v2222 = vsel %vm2196, %v2189, %v2053
    %v2223 = vsel %vm2196, %v2190, %v2055
    %v2224 = vsel %vm2196, %v2191, %v2057
    %v2225 = vsel %vm2196, %v2192, %v2059
    %v2226 = vsel %vm2196, %v2193, %v2061
    %v2227 = vsel %vm2196, %v2194, %v2063
    %v2228 = vsel %vm2196, %v2195, %v2065
    %v2229 = vld [vmem:[%s3] sm:$0xff]
    %v2230 = vld [vmem:[%s3 + $0x8] sm:$0xff]
    %v2231 = vld [vmem:[%s3 + $0x10] sm:$0xff]
    %v2232 = vld [vmem:[%s3 + $0x18] sm:$0xff]
    %v2233 = vld [vmem:[%s3 + $0x20] sm:$0xff]
    %v2234 = vld [vmem:[%s3 + $0x28] sm:$0xff]
    %v2235 = vld [vmem:[%s3 + $0x30] sm:$0xff]
    %v2236 = vld [vmem:[%s3 + $0x38] sm:$0xff]
    %v2237 = vld [vmem:[%s3 + $0x40] sm:$0xff]
    %v2238 = vld [vmem:[%s3 + $0x48] sm:$0xff]
    %v2239 = vld [vmem:[%s4] sm:$0x1]
    %v2241 = vlaneseq
    %v2242 = vshrl.u32 %v2241, 7
    %v2243 = vsub.s32 0, %v2242
    %v2244 = vrot.slane %v2239, %v2243
    %vm2246 = vcmask 654336
    %v2248 = vsel %vm2246, %v2197, 0
    %v2251 = vsel %vm2246, %v2198, 0
    %v2254 = vsel %vm2246, %v2199, 0
    %v2257 = vsel %vm2246, %v2200, 0
    %v2260 = vsel %vm2246, %v2201, 0
    %v2263 = vsel %vm2246, %v2202, 0
    %v2266 = vsel %vm2246, %v2203, 0
    %v2269 = vsel %vm2246, %v2204, 0
    %v2272 = vsel %vm2246, %v2205, 0
    %v2275 = vsel %vm2246, %v2206, 0
    %v2278 = vsel %vm2246, %v2207, 0
    %v2281 = vsel %vm2246, %v2208, 0
    %v2284 = vsel %vm2246, %v2209, 0
    %v2287 = vsel %vm2246, %v2210, 0
    %v2290 = vsel %vm2246, %v2211, 0
    %v2293 = vsel %vm2246, %v2212, 0
    %v2296 = vsel %vm2246, %v2213, 0
    %v2299 = vsel %vm2246, %v2214, 0
    %v2302 = vsel %vm2246, %v2215, 0
    %v2305 = vsel %vm2246, %v2216, 0
    %v2308 = vsel %vm2246, %v2217, 0
    %v2311 = vsel %vm2246, %v2218, 0
    %v2314 = vsel %vm2246, %v2219, 0
    %v2317 = vsel %vm2246, %v2220, 0
    %v2320 = vsel %vm2246, %v2221, 0
    %v2323 = vsel %vm2246, %v2222, 0
    %v2326 = vsel %vm2246, %v2223, 0
    %v2329 = vsel %vm2246, %v2224, 0
    %v2332 = vsel %vm2246, %v2225, 0
    %v2335 = vsel %vm2246, %v2226, 0
    %v2338 = vsel %vm2246, %v2227, 0
    %v2341 = vsel %vm2246, %v2228, 0
    %2343 = vmatprep.subr.mxu0 0.0
    %2344 = vmatpush1.msra.mxu0 %v2229
    %2345 = vmatprep.subr.mxu0 0.0
    %2346 = vmatpush1.msra.mxu0 %v2230
    %2347 = vmatprep.subr.mxu0 0.0
    %2348 = vmatpush1.msra.mxu0 %v2231
    %2349 = vmatprep.subr.mxu0 0.0
    %2350 = vmatpush1.msra.mxu0 %v2232
    %2351 = vmatprep.subr.mxu0 0.0
    %2352 = vmatpush1.msra.mxu0 %v2233
    %2353 = vmatprep.subr.mxu0 0.0
    %2354 = vmatpush1.msra.mxu0 %v2234
    %2355 = vmatprep.subr.mxu0 0.0
    %2356 = vmatpush1.msra.mxu0 %v2235
    %2357 = vmatprep.subr.mxu0 0.0
    %2358 = vmatpush1.msra.mxu0 %v2236
    %2359 = vmatprep.subr.mxu0 0.0
    %2360 = vmatpush1.msra.mxu0 %v2237
    %2361 = vmatprep.subr.mxu0 0.0
    %2362 = vmatpush1.msra.mxu0 %v2238
    %2363 = vmatprep.subr.mxu0 0.0
    %2364 = vmatpush1.msra.mxu0 0.0
    %2365 = vmatprep.subr.mxu0 0.0
    %2366 = vmatpush1.msra.mxu0 0.0
    %2367 = vmatprep.subr.mxu0 0.0
    %2368 = vmatpush1.msra.mxu0 0.0
    %2369 = vmatprep.subr.mxu0 0.0
    %2370 = vmatpush1.msra.mxu0 0.0
    %2371 = vmatprep.subr.mxu0 0.0
    %2372 = vmatpush1.msra.mxu0 0.0
    %2373 = vmatprep.subr.mxu0 0.0
    %2374 = vmatpush1.msra.mxu0 0.0
    %2375 = vmatprep.subr.mxu0 0.0
    %2376 = vmatpush1.msra.mxu0 0.0
    %2377 = vmatprep.subr.mxu0 0.0
    %2378 = vmatpush1.msra.mxu0 0.0
    %2379 = vmatprep.subr.mxu0 0.0
    %2380 = vmatpush1.msra.mxu0 0.0
    %2381 = vmatprep.subr.mxu0 0.0
    %2382 = vmatpush1.msra.mxu0 0.0
    %2383 = vmatprep.subr.mxu0 0.0
    %2384 = vmatpush1.msra.mxu0 0.0
    %2385 = vmatprep.subr.mxu0 0.0
    %2386 = vmatpush1.msra.mxu0 0.0
    %2387 = vmatprep.subr.mxu0 0.0
    %2388 = vmatpush1.msra.mxu0 0.0
    %2389 = vmatprep.subr.mxu0 0.0
    %2390 = vmatpush1.msra.mxu0 0.0
    %2391 = vmatprep.subr.mxu0 0.0
    %2392 = vmatpush1.msra.mxu0 0.0
    %2393 = vmatprep.subr.mxu0 0.0
    %2394 = vmatpush1.msra.mxu0 0.0
    %2395 = vmatprep.subr.mxu0 0.0
    %2396 = vmatpush1.msra.mxu0 0.0
    %2397 = vmatprep.subr.mxu0 0.0
    %2398 = vmatpush1.msra.mxu0 0.0
    %2399 = vmatprep.subr.mxu0 0.0
    %2400 = vmatpush1.msra.mxu0 0.0
    %2401 = vmatprep.subr.mxu0 0.0
    %2402 = vmatpush1.msra.mxu0 0.0
    %2403 = vmatprep.subr.mxu0 0.0
    %2404 = vmatpush1.msra.mxu0 0.0
    %2405 = vmatprep.subr.mxu0 0.0
    %2406 = vmatpush1.msra.mxu0 0.0
    %2407 = vmatprep.mubr.f32.mxu0 0.0
    %2408 = vmatmul.mubr.f32.gmra.mrb[0].mxu0 %v2248
    %v2409 = vpop.f32.mrb[0].mxu0
    %v2410 = vadd.f32 %v2244, %v2409
    %v2411 = vpop.f32.mrb[0].mxu0
    %2412 = vmatprep.mubr.f32.mxu0 0.0
    %2413 = vmatmul.mubr.f32.gmra.mrb[0].mxu0 %v2251
    %v2414 = vpop.f32.mrb[0].mxu0
    %v2415 = vadd.f32 %v2244, %v2414
    %v2416 = vpop.f32.mrb[0].mxu0
    %2417 = vmatprep.mubr.f32.mxu0 0.0
    %2418 = vmatmul.mubr.f32.gmra.mrb[0].mxu0 %v2254
    %v2419 = vpop.f32.mrb[0].mxu0
    %v2420 = vadd.f32 %v2244, %v2419
    %v2421 = vpop.f32.mrb[0].mxu0
    %2422 = vmatprep.mubr.f32.mxu0 0.0
    %2423 = vmatmul.mubr.f32.gmra.mrb[0].mxu0 %v2257
    %v2424 = vpop.f32.mrb[0].mxu0
    %v2425 = vadd.f32 %v2244, %v2424
    %v2426 = vpop.f32.mrb[0].mxu0
    %2427 = vmatprep.mubr.f32.mxu0 0.0
    %2428 = vmatmul.mubr.f32.gmra.mrb[0].mxu0 %v2260
    %v2429 = vpop.f32.mrb[0].mxu0
    %v2430 = vadd.f32 %v2244, %v2429
    %v2431 = vpop.f32.mrb[0].mxu0
    %2432 = vmatprep.mubr.f32.mxu0 0.0
    %2433 = vmatmul.mubr.f32.gmra.mrb[0].mxu0 %v2263
    %v2434 = vpop.f32.mrb[0].mxu0
    %v2435 = vadd.f32 %v2244, %v2434
    %v2436 = vpop.f32.mrb[0].mxu0
    %2437 = vmatprep.mubr.f32.mxu0 0.0
    %2438 = vmatmul.mubr.f32.gmra.mrb[0].mxu0 %v2266
    %v2439 = vpop.f32.mrb[0].mxu0
    %v2440 = vadd.f32 %v2244, %v2439
    %v2441 = vpop.f32.mrb[0].mxu0
    %2442 = vmatprep.mubr.f32.mxu0 0.0
    %2443 = vmatmul.mubr.f32.gmra.mrb[0].mxu0 %v2269
    %v2444 = vpop.f32.mrb[0].mxu0
    %v2445 = vadd.f32 %v2244, %v2444
    %v2446 = vpop.f32.mrb[0].mxu0
    %2447 = vmatprep.mubr.f32.mxu0 0.0
    %2448 = vmatmul.mubr.f32.gmra.mrb[0].mxu0 %v2272
    %v2449 = vpop.f32.mrb[0].mxu0
    %v2450 = vadd.f32 %v2244, %v2449
    %v2451 = vpop.f32.mrb[0].mxu0
    %2452 = vmatprep.mubr.f32.mxu0 0.0
    %2453 = vmatmul.mubr.f32.gmra.mrb[0].mxu0 %v2275
    %v2454 = vpop.f32.mrb[0].mxu0
    %v2455 = vadd.f32 %v2244, %v2454
    %v2456 = vpop.f32.mrb[0].mxu0
    %2457 = vmatprep.mubr.f32.mxu0 0.0
    %2458 = vmatmul.mubr.f32.gmra.mrb[0].mxu0 %v2278
    %v2459 = vpop.f32.mrb[0].mxu0
    %v2460 = vadd.f32 %v2244, %v2459
    %v2461 = vpop.f32.mrb[0].mxu0
    %2462 = vmatprep.mubr.f32.mxu0 0.0
    %2463 = vmatmul.mubr.f32.gmra.mrb[0].mxu0 %v2281
    %v2464 = vpop.f32.mrb[0].mxu0
    %v2465 = vadd.f32 %v2244, %v2464
    %v2466 = vpop.f32.mrb[0].mxu0
    %2467 = vmatprep.mubr.f32.mxu0 0.0
    %2468 = vmatmul.mubr.f32.gmra.mrb[0].mxu0 %v2284
    %v2469 = vpop.f32.mrb[0].mxu0
    %v2470 = vadd.f32 %v2244, %v2469
    %v2471 = vpop.f32.mrb[0].mxu0
    %2472 = vmatprep.mubr.f32.mxu0 0.0
    %2473 = vmatmul.mubr.f32.gmra.mrb[0].mxu0 %v2287
    %v2474 = vpop.f32.mrb[0].mxu0
    %v2475 = vadd.f32 %v2244, %v2474
    %v2476 = vpop.f32.mrb[0].mxu0
    %2477 = vmatprep.mubr.f32.mxu0 0.0
    %2478 = vmatmul.mubr.f32.gmra.mrb[0].mxu0 %v2290
    %v2479 = vpop.f32.mrb[0].mxu0
    %v2480 = vadd.f32 %v2244, %v2479
    %v2481 = vpop.f32.mrb[0].mxu0
    %2482 = vmatprep.mubr.f32.mxu0 0.0
    %2483 = vmatmul.mubr.f32.gmra.mrb[0].mxu0 %v2293
    %v2484 = vpop.f32.mrb[0].mxu0
    %v2485 = vadd.f32 %v2244, %v2484
    %v2486 = vpop.f32.mrb[0].mxu0
    %2487 = vmatprep.mubr.f32.mxu0 0.0
    %2488 = vmatmul.mubr.f32.gmra.mrb[0].mxu0 %v2296
    %v2489 = vpop.f32.mrb[0].mxu0
    %v2490 = vadd.f32 %v2244, %v2489
    %v2491 = vpop.f32.mrb[0].mxu0
    %2492 = vmatprep.mubr.f32.mxu0 0.0
    %2493 = vmatmul.mubr.f32.gmra.mrb[0].mxu0 %v2299
    %v2494 = vpop.f32.mrb[0].mxu0
    %v2495 = vadd.f32 %v2244, %v2494
    %v2496 = vpop.f32.mrb[0].mxu0
    %2497 = vmatprep.mubr.f32.mxu0 0.0
    %2498 = vmatmul.mubr.f32.gmra.mrb[0].mxu0 %v2302
    %v2499 = vpop.f32.mrb[0].mxu0
    %v2500 = vadd.f32 %v2244, %v2499
    %v2501 = vpop.f32.mrb[0].mxu0
    %2502 = vmatprep.mubr.f32.mxu0 0.0
    %2503 = vmatmul.mubr.f32.gmra.mrb[0].mxu0 %v2305
    %v2504 = vpop.f32.mrb[0].mxu0
    %v2505 = vadd.f32 %v2244, %v2504
    %v2506 = vpop.f32.mrb[0].mxu0
    %2507 = vmatprep.mubr.f32.mxu0 0.0
    %2508 = vmatmul.mubr.f32.gmra.mrb[0].mxu0 %v2308
    %v2509 = vpop.f32.mrb[0].mxu0
    %v2510 = vadd.f32 %v2244, %v2509
    %v2511 = vpop.f32.mrb[0].mxu0
    %2512 = vmatprep.mubr.f32.mxu0 0.0
    %2513 = vmatmul.mubr.f32.gmra.mrb[0].mxu0 %v2311
    %v2514 = vpop.f32.mrb[0].mxu0
    %v2515 = vadd.f32 %v2244, %v2514
    %v2516 = vpop.f32.mrb[0].mxu0
    %2517 = vmatprep.mubr.f32.mxu0 0.0
    %2518 = vmatmul.mubr.f32.gmra.mrb[0].mxu0 %v2314
    %v2519 = vpop.f32.mrb[0].mxu0
    %v2520 = vadd.f32 %v2244, %v2519
    %v2521 = vpop.f32.mrb[0].mxu0
    %2522 = vmatprep.mubr.f32.mxu0 0.0
    %2523 = vmatmul.mubr.f32.gmra.mrb[0].mxu0 %v2317
    %v2524 = vpop.f32.mrb[0].mxu0
    %v2525 = vadd.f32 %v2244, %v2524
    %v2526 = vpop.f32.mrb[0].mxu0
    %2527 = vmatprep.mubr.f32.mxu0 0.0
    %2528 = vmatmul.mubr.f32.gmra.mrb[0].mxu0 %v2320
    %v2529 = vpop.f32.mrb[0].mxu0
    %v2530 = vadd.f32 %v2244, %v2529
    %v2531 = vpop.f32.mrb[0].mxu0
    %2532 = vmatprep.mubr.f32.mxu0 0.0
    %2533 = vmatmul.mubr.f32.gmra.mrb[0].mxu0 %v2323
    %v2534 = vpop.f32.mrb[0].mxu0
    %v2535 = vadd.f32 %v2244, %v2534
    %v2536 = vpop.f32.mrb[0].mxu0
    %2537 = vmatprep.mubr.f32.mxu0 0.0
    %2538 = vmatmul.mubr.f32.gmra.mrb[0].mxu0 %v2326
    %v2539 = vpop.f32.mrb[0].mxu0
    %v2540 = vadd.f32 %v2244, %v2539
    %v2541 = vpop.f32.mrb[0].mxu0
    %2542 = vmatprep.mubr.f32.mxu0 0.0
    %2543 = vmatmul.mubr.f32.gmra.mrb[0].mxu0 %v2329
    %v2544 = vpop.f32.mrb[0].mxu0
    %v2545 = vadd.f32 %v2244, %v2544
    %v2546 = vpop.f32.mrb[0].mxu0
    %2547 = vmatprep.mubr.f32.mxu0 0.0
    %2548 = vmatmul.mubr.f32.gmra.mrb[0].mxu0 %v2332
    %v2549 = vpop.f32.mrb[0].mxu0
    %v2550 = vadd.f32 %v2244, %v2549
    %v2551 = vpop.f32.mrb[0].mxu0
    %2552 = vmatprep.mubr.f32.mxu0 0.0
    %2553 = vmatmul.mubr.f32.gmra.mrb[0].mxu0 %v2335
    %v2554 = vpop.f32.mrb[0].mxu0
    %v2555 = vadd.f32 %v2244, %v2554
    %v2556 = vpop.f32.mrb[0].mxu0
    %2557 = vmatprep.mubr.f32.mxu0 0.0
    %2558 = vmatmul.mubr.f32.gmra.mrb[0].mxu0 %v2338
    %v2559 = vpop.f32.mrb[0].mxu0
    %v2560 = vadd.f32 %v2244, %v2559
    %v2561 = vpop.f32.mrb[0].mxu0
    %2562 = vmatprep.mubr.f32.mxu0 0.0
    %2563 = vmatmul.mubr.f32.gmra.mrb[0].mxu0 %v2341
    %v2564 = vpop.f32.mrb[0].mxu0
    %v2565 = vadd.f32 %v2244, %v2564
    %v2566 = vpop.f32.mrb[0].mxu0
    %2567 = vdwg.mxu0
    %v2568 = vmax.f32 %v2410, 0.0
    %v2569 = vmax.f32 %v2415, 0.0
    %v2570 = vmax.f32 %v2420, 0.0
    %v2571 = vmax.f32 %v2425, 0.0
    %v2572 = vmax.f32 %v2430, 0.0
    %v2573 = vmax.f32 %v2435, 0.0
    %v2574 = vmax.f32 %v2440, 0.0
    %v2575 = vmax.f32 %v2445, 0.0
    %v2576 = vmax.f32 %v2450, 0.0
    %v2577 = vmax.f32 %v2455, 0.0
    %v2578 = vmax.f32 %v2460, 0.0
    %v2579 = vmax.f32 %v2465, 0.0
    %v2580 = vmax.f32 %v2470, 0.0
    %v2581 = vmax.f32 %v2475, 0.0
    %v2582 = vmax.f32 %v2480, 0.0
    %v2583 = vmax.f32 %v2485, 0.0
    %v2584 = vmax.f32 %v2490, 0.0
    %v2585 = vmax.f32 %v2495, 0.0
    %v2586 = vmax.f32 %v2500, 0.0
    %v2587 = vmax.f32 %v2505, 0.0
    %v2588 = vmax.f32 %v2510, 0.0
    %v2589 = vmax.f32 %v2515, 0.0
    %v2590 = vmax.f32 %v2520, 0.0
    %v2591 = vmax.f32 %v2525, 0.0
    %v2592 = vmax.f32 %v2530, 0.0
    %v2593 = vmax.f32 %v2535, 0.0
    %v2594 = vmax.f32 %v2540, 0.0
    %v2595 = vmax.f32 %v2545, 0.0
    %v2596 = vmax.f32 %v2550, 0.0
    %v2597 = vmax.f32 %v2555, 0.0
    %v2598 = vmax.f32 %v2560, 0.0
    %v2599 = vmax.f32 %v2565, 0.0
    %v2600 = vadd.s32 %v89, 8
    %v2601 = vadd.s32 %v89, 16
    %v2602 = vadd.s32 %v89, 24
    %vm2603 = vcmp.lt.s32.totalorder %v89, 24
    %vm2604 = vcmp.lt.s32.totalorder %v2600, 24
    %vm2605 = vcmp.lt.s32.totalorder %v2601, 24
    %vm2606 = vcmp.lt.s32.totalorder %v2602, 24
    %v2607 = vsel %vm2603, 1, 0
    %v2608 = vsel %vm2604, 1, 0
    %v2609 = vsel %vm2605, 1, 0
    %v2610 = vsel %vm2606, 1, 0
    %vm2611 = vcmp.eq.s32.totalorder %v2607, 1
    %vm2612 = vcmp.eq.s32.totalorder %v2608, 1
    %vm2613 = vcmp.eq.s32.totalorder %v2609, 1
    %vm2614 = vcmp.eq.s32.totalorder %v2610, 1
    %v2615 = vsel %vm2611, %v2568, 0.0
    %v2616 = vsel %vm2612, %v2569, 0.0
    %v2617 = vsel %vm2613, %v2570, 0.0
    %v2618 = vsel %vm2614, %v2571, 0.0
    %v2619 = vsel %vm2611, %v2572, 0.0
    %v2620 = vsel %vm2612, %v2573, 0.0
    %v2621 = vsel %vm2613, %v2574, 0.0
    %v2622 = vsel %vm2614, %v2575, 0.0
    %v2623 = vsel %vm2611, %v2576, 0.0
    %v2624 = vsel %vm2612, %v2577, 0.0
    %v2625 = vsel %vm2613, %v2578, 0.0
    %v2626 = vsel %vm2614, %v2579, 0.0
    %v2627 = vsel %vm2611, %v2580, 0.0
    %v2628 = vsel %vm2612, %v2581, 0.0
    %v2629 = vsel %vm2613, %v2582, 0.0
    %v2630 = vsel %vm2614, %v2583, 0.0
    %v2631 = vsel %vm2611, %v2584, 0.0
    %v2632 = vsel %vm2612, %v2585, 0.0
    %v2633 = vsel %vm2613, %v2586, 0.0
    %v2634 = vsel %vm2614, %v2587, 0.0
    %v2635 = vsel %vm2611, %v2588, 0.0
    %v2636 = vsel %vm2612, %v2589, 0.0
    %v2637 = vsel %vm2613, %v2590, 0.0
    %v2638 = vsel %vm2614, %v2591, 0.0
    %v2639 = vsel %vm2611, %v2592, 0.0
    %v2640 = vsel %vm2612, %v2593, 0.0
    %v2641 = vsel %vm2613, %v2594, 0.0
    %v2642 = vsel %vm2614, %v2595, 0.0
    %v2643 = vsel %vm2611, %v2596, 0.0
    %v2644 = vsel %vm2612, %v2597, 0.0
    %v2645 = vsel %vm2613, %v2598, 0.0
    %v2646 = vsel %vm2614, %v2599, 0.0
    %v2647 = vsel %vm929, %v2615, -inf
    %v2648 = vsel %vm929, %v2616, -inf
    %v2649 = vmax.f32 %v2647, %v2648
    %v2650 = vsel %vm929, %v2617, -inf
    %v2651 = vmax.f32 %v2649, %v2650
    %v2652 = vsel %vm929, %v2618, -inf
    %v2653 = vmax.f32 %v2651, %v2652
    %v2654 = vrot.slane %v2653, 4
    %v2655 = vmax.f32 %v2653, %v2654
    %v2656 = vrot.slane %v2655, 2
    %v2657 = vmax.f32 %v2655, %v2656
    %v2658 = vrot.slane %v2657, 1
    %v2659 = vmax.f32 %v2657, %v2658
    %v2660 = vsel %vm929, %v2619, -inf
    %v2661 = vsel %vm929, %v2620, -inf
    %v2662 = vmax.f32 %v2660, %v2661
    %v2663 = vsel %vm929, %v2621, -inf
    %v2664 = vmax.f32 %v2662, %v2663
    %v2665 = vsel %vm929, %v2622, -inf
    %v2666 = vmax.f32 %v2664, %v2665
    %v2667 = vrot.slane %v2666, 4
    %v2668 = vmax.f32 %v2666, %v2667
    %v2669 = vrot.slane %v2668, 2
    %v2670 = vmax.f32 %v2668, %v2669
    %v2671 = vrot.slane %v2670, 1
    %v2672 = vmax.f32 %v2670, %v2671
    %v2673 = vsel %vm929, %v2623, -inf
    %v2674 = vsel %vm929, %v2624, -inf
    %v2675 = vmax.f32 %v2673, %v2674
    %v2676 = vsel %vm929, %v2625, -inf
    %v2677 = vmax.f32 %v2675, %v2676
    %v2678 = vsel %vm929, %v2626, -inf
    %v2679 = vmax.f32 %v2677, %v2678
    %v2680 = vrot.slane %v2679, 4
    %v2681 = vmax.f32 %v2679, %v2680
    %v2682 = vrot.slane %v2681, 2
    %v2683 = vmax.f32 %v2681, %v2682
    %v2684 = vrot.slane %v2683, 1
    %v2685 = vmax.f32 %v2683, %v2684
    %v2686 = vsel %vm929, %v2627, -inf
    %v2687 = vsel %vm929, %v2628, -inf
    %v2688 = vmax.f32 %v2686, %v2687
    %v2689 = vsel %vm929, %v2629, -inf
    %v2690 = vmax.f32 %v2688, %v2689
    %v2691 = vsel %vm929, %v2630, -inf
    %v2692 = vmax.f32 %v2690, %v2691
    %v2693 = vrot.slane %v2692, 4
    %v2694 = vmax.f32 %v2692, %v2693
    %v2695 = vrot.slane %v2694, 2
    %v2696 = vmax.f32 %v2694, %v2695
    %v2697 = vrot.slane %v2696, 1
    %v2698 = vmax.f32 %v2696, %v2697
    %v2699 = vsel %vm929, %v2631, -inf
    %v2700 = vsel %vm929, %v2632, -inf
    %v2701 = vmax.f32 %v2699, %v2700
    %v2702 = vsel %vm929, %v2633, -inf
    %v2703 = vmax.f32 %v2701, %v2702
    %v2704 = vsel %vm929, %v2634, -inf
    %v2705 = vmax.f32 %v2703, %v2704
    %v2706 = vrot.slane %v2705, 4
    %v2707 = vmax.f32 %v2705, %v2706
    %v2708 = vrot.slane %v2707, 2
    %v2709 = vmax.f32 %v2707, %v2708
    %v2710 = vrot.slane %v2709, 1
    %v2711 = vmax.f32 %v2709, %v2710
    %v2712 = vsel %vm929, %v2635, -inf
    %v2713 = vsel %vm929, %v2636, -inf
    %v2714 = vmax.f32 %v2712, %v2713
    %v2715 = vsel %vm929, %v2637, -inf
    %v2716 = vmax.f32 %v2714, %v2715
    %v2717 = vsel %vm929, %v2638, -inf
    %v2718 = vmax.f32 %v2716, %v2717
    %v2719 = vrot.slane %v2718, 4
    %v2720 = vmax.f32 %v2718, %v2719
    %v2721 = vrot.slane %v2720, 2
    %v2722 = vmax.f32 %v2720, %v2721
    %v2723 = vrot.slane %v2722, 1
    %v2724 = vmax.f32 %v2722, %v2723
    %v2725 = vsel %vm929, %v2639, -inf
    %v2726 = vsel %vm929, %v2640, -inf
    %v2727 = vmax.f32 %v2725, %v2726
    %v2728 = vsel %vm929, %v2641, -inf
    %v2729 = vmax.f32 %v2727, %v2728
    %v2730 = vsel %vm929, %v2642, -inf
    %v2731 = vmax.f32 %v2729, %v2730
    %v2732 = vrot.slane %v2731, 4
    %v2733 = vmax.f32 %v2731, %v2732
    %v2734 = vrot.slane %v2733, 2
    %v2735 = vmax.f32 %v2733, %v2734
    %v2736 = vrot.slane %v2735, 1
    %v2737 = vmax.f32 %v2735, %v2736
    %v2738 = vsel %vm929, %v2643, -inf
    %v2739 = vsel %vm929, %v2644, -inf
    %v2740 = vmax.f32 %v2738, %v2739
    %v2741 = vsel %vm929, %v2645, -inf
    %v2742 = vmax.f32 %v2740, %v2741
    %v2743 = vsel %vm929, %v2646, -inf
    %v2744 = vmax.f32 %v2742, %v2743
    %v2745 = vrot.slane %v2744, 4
    %v2746 = vmax.f32 %v2744, %v2745
    %v2747 = vrot.slane %v2746, 2
    %v2748 = vmax.f32 %v2746, %v2747
    %v2749 = vrot.slane %v2748, 1
    %v2750 = vmax.f32 %v2748, %v2749
    %vm2759 = vcmask 1041409
    %v2760 = vsel %vm2759, %v2672, %v2659
    %vm2761 = vcmask 1042434
    %v2762 = vsel %vm2761, %v2685, %v2760
    %vm2763 = vcmask 1043459
    %v2764 = vsel %vm2763, %v2698, %v2762
    %vm2765 = vcmask 1044484
    %v2766 = vsel %vm2765, %v2711, %v2764
    %vm2767 = vcmask 1045509
    %v2768 = vsel %vm2767, %v2724, %v2766
    %vm2769 = vcmask 1046534
    %v2770 = vsel %vm2769, %v2737, %v2768
    %vm2771 = vcmask 1047559
    %v2772 = vsel %vm2771, %v2750, %v2770
    %2774 = vst.msk [vmem:[#allocation2] sm:$0xff] %vm929, %v2772
    %v2775 = vsel %vm929, %v2615, 0.0
    %v2776 = vsel %vm929, %v2616, 0.0
    %v2777 = vadd.f32 %v2775, %v2776
    %v2778 = vsel %vm929, %v2617, 0.0
    %v2779 = vadd.f32 %v2777, %v2778
    %v2780 = vsel %vm929, %v2618, 0.0
    %v2781 = vadd.f32 %v2779, %v2780
    %v2782 = vrot.slane %v2781, 4
    %v2783 = vadd.f32 %v2781, %v2782
    %v2784 = vrot.slane %v2783, 2
    %v2785 = vadd.f32 %v2783, %v2784
    %v2786 = vrot.slane %v2785, 1
    %v2787 = vadd.f32 %v2785, %v2786
    %v2788 = vsel %vm929, %v2619, 0.0
    %v2789 = vsel %vm929, %v2620, 0.0
    %v2790 = vadd.f32 %v2788, %v2789
    %v2791 = vsel %vm929, %v2621, 0.0
    %v2792 = vadd.f32 %v2790, %v2791
    %v2793 = vsel %vm929, %v2622, 0.0
    %v2794 = vadd.f32 %v2792, %v2793
    %v2795 = vrot.slane %v2794, 4
    %v2796 = vadd.f32 %v2794, %v2795
    %v2797 = vrot.slane %v2796, 2
    %v2798 = vadd.f32 %v2796, %v2797
    %v2799 = vrot.slane %v2798, 1
    %v2800 = vadd.f32 %v2798, %v2799
    %v2801 = vsel %vm929, %v2623, 0.0
    %v2802 = vsel %vm929, %v2624, 0.0
    %v2803 = vadd.f32 %v2801, %v2802
    %v2804 = vsel %vm929, %v2625, 0.0
    %v2805 = vadd.f32 %v2803, %v2804
    %v2806 = vsel %vm929, %v2626, 0.0
    %v2807 = vadd.f32 %v2805, %v2806
    %v2808 = vrot.slane %v2807, 4
    %v2809 = vadd.f32 %v2807, %v2808
    %v2810 = vrot.slane %v2809, 2
    %v2811 = vadd.f32 %v2809, %v2810
    %v2812 = vrot.slane %v2811, 1
    %v2813 = vadd.f32 %v2811, %v2812
    %v2814 = vsel %vm929, %v2627, 0.0
    %v2815 = vsel %vm929, %v2628, 0.0
    %v2816 = vadd.f32 %v2814, %v2815
    %v2817 = vsel %vm929, %v2629, 0.0
    %v2818 = vadd.f32 %v2816, %v2817
    %v2819 = vsel %vm929, %v2630, 0.0
    %v2820 = vadd.f32 %v2818, %v2819
    %v2821 = vrot.slane %v2820, 4
    %v2822 = vadd.f32 %v2820, %v2821
    %v2823 = vrot.slane %v2822, 2
    %v2824 = vadd.f32 %v2822, %v2823
    %v2825 = vrot.slane %v2824, 1
    %v2826 = vadd.f32 %v2824, %v2825
    %v2827 = vsel %vm929, %v2631, 0.0
    %v2828 = vsel %vm929, %v2632, 0.0
    %v2829 = vadd.f32 %v2827, %v2828
    %v2830 = vsel %vm929, %v2633, 0.0
    %v2831 = vadd.f32 %v2829, %v2830
    %v2832 = vsel %vm929, %v2634, 0.0
    %v2833 = vadd.f32 %v2831, %v2832
    %v2834 = vrot.slane %v2833, 4
    %v2835 = vadd.f32 %v2833, %v2834
    %v2836 = vrot.slane %v2835, 2
    %v2837 = vadd.f32 %v2835, %v2836
    %v2838 = vrot.slane %v2837, 1
    %v2839 = vadd.f32 %v2837, %v2838
    %v2840 = vsel %vm929, %v2635, 0.0
    %v2841 = vsel %vm929, %v2636, 0.0
    %v2842 = vadd.f32 %v2840, %v2841
    %v2843 = vsel %vm929, %v2637, 0.0
    %v2844 = vadd.f32 %v2842, %v2843
    %v2845 = vsel %vm929, %v2638, 0.0
    %v2846 = vadd.f32 %v2844, %v2845
    %v2847 = vrot.slane %v2846, 4
    %v2848 = vadd.f32 %v2846, %v2847
    %v2849 = vrot.slane %v2848, 2
    %v2850 = vadd.f32 %v2848, %v2849
    %v2851 = vrot.slane %v2850, 1
    %v2852 = vadd.f32 %v2850, %v2851
    %v2853 = vsel %vm929, %v2639, 0.0
    %v2854 = vsel %vm929, %v2640, 0.0
    %v2855 = vadd.f32 %v2853, %v2854
    %v2856 = vsel %vm929, %v2641, 0.0
    %v2857 = vadd.f32 %v2855, %v2856
    %v2858 = vsel %vm929, %v2642, 0.0
    %v2859 = vadd.f32 %v2857, %v2858
    %v2860 = vrot.slane %v2859, 4
    %v2861 = vadd.f32 %v2859, %v2860
    %v2862 = vrot.slane %v2861, 2
    %v2863 = vadd.f32 %v2861, %v2862
    %v2864 = vrot.slane %v2863, 1
    %v2865 = vadd.f32 %v2863, %v2864
    %v2866 = vsel %vm929, %v2643, 0.0
    %v2867 = vsel %vm929, %v2644, 0.0
    %v2868 = vadd.f32 %v2866, %v2867
    %v2869 = vsel %vm929, %v2645, 0.0
    %v2870 = vadd.f32 %v2868, %v2869
    %v2871 = vsel %vm929, %v2646, 0.0
    %v2872 = vadd.f32 %v2870, %v2871
    %v2873 = vrot.slane %v2872, 4
    %v2874 = vadd.f32 %v2872, %v2873
    %v2875 = vrot.slane %v2874, 2
    %v2876 = vadd.f32 %v2874, %v2875
    %v2877 = vrot.slane %v2876, 1
    %v2878 = vadd.f32 %v2876, %v2877
    %v2879 = vmul.f32 %v2787, 0.041666668
    %v2880 = vmul.f32 %v2800, 0.041666668
    %v2881 = vmul.f32 %v2813, 0.041666668
    %v2882 = vmul.f32 %v2826, 0.041666668
    %v2883 = vmul.f32 %v2839, 0.041666668
    %v2884 = vmul.f32 %v2852, 0.041666668
    %v2885 = vmul.f32 %v2865, 0.041666668
    %v2886 = vmul.f32 %v2878, 0.041666668
    %v2895 = vsel %vm2759, %v2880, %v2879
    %v2896 = vsel %vm2761, %v2881, %v2895
    %v2897 = vsel %vm2763, %v2882, %v2896
    %v2898 = vsel %vm2765, %v2883, %v2897
    %v2899 = vsel %vm2767, %v2884, %v2898
    %v2900 = vsel %vm2769, %v2885, %v2899
    %v2901 = vsel %vm2771, %v2886, %v2900
    %2903 = vst.msk [vmem:[#allocation4] sm:$0xff] %vm929, %v2901
    // Predicated region
    $region22: #{tpu_custom_call.1} parent=1 // pred_check
      _
    $region23: #{tpu_custom_call.1} parent=1 // pred_check_branch
      %2905 = sbr.rel (0) target = $region25
    $region24: #{tpu_custom_call.1} parent=1 // pred_region
      %s2907 = ssub.s32 128, 128
      %2908 = vsyncadd [#allocation3], %s2907
      %s2910 = sshll.u32 [#allocation2], 4
      %s2911 = int_to_ptr.vmem [resolvable:$true] %s2910
      %2913 = dma.vmem_to_hbm [thread:$0]  %s2911, 128, %s5, [#allocation3]
    $region25: #{tpu_custom_call.1} parent=1 // pred_fallthru
      _
    // Predicated region
    $region26: #{tpu_custom_call.1} parent=1 // pred_check
      _
    $region27: #{tpu_custom_call.1} parent=1 // pred_check_branch
      %2915 = sbr.rel (0) target = $region29
    $region28: #{tpu_custom_call.1} parent=1 // pred_region
      %s2917 = ssub.s32 128, 128
      %2918 = vsyncadd [#allocation5], %s2917
      %s2920 = sshll.u32 [#allocation4], 4
      %s2921 = int_to_ptr.vmem [resolvable:$true] %s2920
      %2923 = dma.vmem_to_hbm [thread:$0]  %s2921, 128, %s6, [#allocation5]
    $region29: #{tpu_custom_call.1} parent=1 // pred_fallthru
      _
    // Predicated region
    $region30: #{tpu_custom_call.1} parent=1 // pred_check
      _
    $region31: #{tpu_custom_call.1} parent=1 // pred_check_branch
      %2925 = sbr.rel (0) target = $region33
    $region32: #{tpu_custom_call.1} parent=1 // pred_region
      %2926 = dma.done [#allocation3], 128
    $region33: #{tpu_custom_call.1} parent=1 // pred_fallthru
      _
    // Predicated region
    $region34: #{tpu_custom_call.1} parent=1 // pred_check
      _
    $region35: #{tpu_custom_call.1} parent=1 // pred_check_branch
      %2928 = sbr.rel (0) target = $region37
    $region36: #{tpu_custom_call.1} parent=1 // pred_region
      %2929 = dma.done [#allocation5], 128
    $region37: #{tpu_custom_call.1} parent=1 // pred_fallthru
      _
    %2930 = vsyncpa [#allocation3], 1
    %2931 = vsyncpa [#allocation5], 1

</llo_original>
